<compile_context>
chip_gen: v6e
topology: v6e:2x2x1
jax: 0.10.0
libtpu: 0.0.40
codegen_flags: <defaults>
</compile_context>

<pallas_src>
import functools
import numpy as np
import jax
import jax.numpy as jnp
from jax.experimental import pallas as pl
from jax.experimental.pallas import tpu as pltpu

INPUT_DIM = 3
HIDDEN_DIM = 16
OUTPUT_DIM = 32
NUM_ACTIONS = 4
NUM_NODES = 8                      # graph size baked into the compiled kernel

NF_W = NUM_NODES * INPUT_DIM       # 24  : flattened node features per graph
ADJ_W = NUM_NODES * NUM_NODES      # 64  : flattened adjacency per graph
PACK1_W = NUM_NODES * HIDDEN_DIM   # 128 : packed hidden width (node i at lanes 16i..16i+15)
PACK2_W = NUM_NODES * OUTPUT_DIM   # 256 : packed layer-2 width (node i at lanes 32i..32i+31)
EXP_W = NUM_NODES * PACK1_W        # 1024: j-major outer-product width for aggregation
MAX_B_TILE = 512                   # keeps VMEM well under the v7x 32 MiB scoped default


def _cdiv(a, b):
    return (a + b - 1) // b


def _round_up(x, m):
    return ((x + m - 1) // m) * m


def _choose_tile(b):
    """Pick (batch_tile, padded_batch, num_tiles): tile multiple of 8, <= MAX_B_TILE,
    and >= 2 grid steps when possible so the 'parallel' axis can span 2 TCs (v7x)."""
    num_tiles = max(1, _cdiv(b, MAX_B_TILE))
    if b > 8:
        num_tiles = max(num_tiles, 2)
    bt = _round_up(_cdiv(b, num_tiles), 8)
    return bt, num_tiles * bt, num_tiles


def _block_diag(w, n):
    """[p, q] -> [n*p, n*q] block-diagonal with w repeated on the diagonal."""
    p, q = w.shape
    return (jnp.eye(n, dtype=w.dtype)[:, None, :, None]
            * w[None, :, None, :]).reshape(n * p, n * q)


@functools.lru_cache(maxsize=1)
def _expansion_mats():
    """Constant 0/1 matrices that expand adjacency and packed-H into the j-major
    outer-product layout:
       a_exp[b, 128*j + 16*i + c] = A[b, i, j]
       h_rep[b, 128*j + 16*i + c] = H1[b, 16*j + c]
    """
    rexp = np.zeros((ADJ_W, EXP_W), np.float32)
    texp = np.zeros((PACK1_W, EXP_W), np.float32)
    for j in range(NUM_NODES):
        for i in range(NUM_NODES):
            col0 = PACK1_W * j + HIDDEN_DIM * i
            rexp[NUM_NODES * i + j, col0:col0 + HIDDEN_DIM] = 1.0
            for c in range(HIDDEN_DIM):
                texp[HIDDEN_DIM * j + c, col0 + c] = 1.0
    return jnp.asarray(rexp), jnp.asarray(texp)


def prepare_params(params):
    """Build the resident (VMEM) weight set from the six Linear params.
    Params are stored [in, out] so the kernel computes x @ W + b (== PyTorch x @ W.T + b)."""
    w1, b1, w2, b2, wq, bq = [jnp.asarray(p, jnp.float32) for p in params]
    w1 = w1.reshape(INPUT_DIM, HIDDEN_DIM)
    w2 = w2.reshape(HIDDEN_DIM, OUTPUT_DIM)
    wq = wq.reshape(OUTPUT_DIM, NUM_ACTIONS)
    rexp, texp = _expansion_mats()
    return dict(
        w1bd=_block_diag(w1, NUM_NODES),                                  # [24, 128]
        b1t=jnp.tile(b1.reshape(1, HIDDEN_DIM), (1, NUM_NODES)),          # [1, 128]
        rexp=rexp,                                                        # [64, 1024]
        texp=texp,                                                        # [128, 1024]
        w2bd=_block_diag(w2, NUM_NODES),                                  # [128, 256]
        b2t=jnp.tile(b2.reshape(1, OUTPUT_DIM), (1, NUM_NODES)),          # [1, 256]
        wqs=jnp.tile(wq / float(NUM_NODES), (NUM_NODES, 1)),              # [256, 4] (mean folded)
        bqr=bq.reshape(1, NUM_ACTIONS),                                   # [1, 4]
    )


def dqn_kernel(nf_ref, adj_ref, w1_ref, b1_ref, rexp_ref, texp_ref,
               w2_ref, b2_ref, wq_ref, bq_ref, q_ref):
    # GNN layer 1 as one shared block-diagonal matmul over the packed graph rows:
    #   h1[b, 16*i + h] = relu(sum_d nf[b, 3*i + d] * w1[d, h] + b1[h])
    h1 = jnp.dot(nf_ref[...], w1_ref[...], preferred_element_type=jnp.float32)
    h1 = jnp.maximum(h1 + b1_ref[...], 0.0)                                     # [bt, 128]

    # Adjacency aggregation (per-graph A @ H) without per-graph matmuls:
    # expand A and H1 into a j-major outer-product layout with two shared 0/1
    # matmuls, multiply elementwise, then sum the 8 lane-aligned slabs.
    a_exp = jnp.dot(adj_ref[...], rexp_ref[...], preferred_element_type=jnp.float32)  # [bt, 1024]
    h_rep = jnp.dot(h1, texp_ref[...], preferred_element_type=jnp.float32)            # [bt, 1024]
    prod = a_exp * h_rep
    agg = prod[:, 0:PACK1_W]
    for j in range(1, NUM_NODES):
        agg = agg + prod[:, j * PACK1_W:(j + 1) * PACK1_W]                       # [bt, 128]

    # GNN layer 2 (block-diagonal) + ReLU.
    h2 = jnp.dot(agg, w2_ref[...], preferred_element_type=jnp.float32)
    h2 = jnp.maximum(h2 + b2_ref[...], 0.0)                                      # [bt, 256]

    # Q head: graph-mean over nodes is folded into wq (sum happens in the contraction).
    q_ref[...] = (jnp.dot(h2, wq_ref[...], preferred_element_type=jnp.float32)
                  + bq_ref[...])                                                 # [bt, 4]


def dqn_forward_batched(node_features, adjacency, params):
    """node_features: [B, NUM_NODES, INPUT_DIM], adjacency: [B, NUM_NODES, NUM_NODES]
    -> Q values [B, NUM_ACTIONS]."""
    b, n, d = node_features.shape
    assert n == NUM_NODES and d == INPUT_DIM
    assert adjacency.shape == (b, NUM_NODES, NUM_NODES)
    p = prepare_params(params)
    bt, b_pad, num_tiles = _choose_tile(b)

    # Lane-dense 2D packing; reshapes of contiguous arrays are free.  Cast / pad
    # only if actually needed (avoids extra full-array HBM passes).
    nf2d = node_features.reshape(b, NF_W)
    adj2d = adjacency.reshape(b, ADJ_W)
    if nf2d.dtype != jnp.float32:
        nf2d = nf2d.astype(jnp.float32)
    if adj2d.dtype != jnp.float32:
        adj2d = adj2d.astype(jnp.float32)
    if b_pad != b:
        nf2d = jnp.pad(nf2d, ((0, b_pad - b), (0, 0)))
        adj2d = jnp.pad(adj2d, ((0, b_pad - b), (0, 0)))

    def _resident(arr):  # whole-array block, constant index -> fetched once, stays in VMEM
        return pl.BlockSpec(arr.shape, lambda i: (0, 0))

    q = pl.pallas_call(
        dqn_kernel,
        out_shape=jax.ShapeDtypeStruct((b_pad, NUM_ACTIONS), jnp.float32),
        grid=(num_tiles,),
        in_specs=[
            pl.BlockSpec((bt, NF_W), lambda i: (i, 0)),
            pl.BlockSpec((bt, ADJ_W), lambda i: (i, 0)),
            _resident(p['w1bd']), _resident(p['b1t']),
            _resident(p['rexp']), _resident(p['texp']),
            _resident(p['w2bd']), _resident(p['b2t']),
            _resident(p['wqs']), _resident(p['bqr']),
        ],
        out_specs=pl.BlockSpec((bt, NUM_ACTIONS), lambda i: (i, 0)),
        compiler_params=pltpu.CompilerParams(
            dimension_semantics=("parallel",)),   # batch tiles split across TCs on v7x
    )(nf2d, adj2d, p['w1bd'], p['b1t'], p['rexp'], p['texp'],
      p['w2bd'], p['b2t'], p['wqs'], p['bqr'])
    return q[:b]


def dqn_forward(node_features, adjacency, params):
    """Original PyTorch DQN.forward semantics: [N, D], [N, N] -> [NUM_ACTIONS]."""
    q = dqn_forward_batched(node_features[None], adjacency[None], params)
    return q[0]


def init_params(key):
    """Deterministic init mimicking PyTorch nn.Linear default (uniform +/- 1/sqrt(fan_in)).
    Weights are stored as [in, out] (transposed relative to PyTorch storage)."""
    ks = jax.random.split(key, 6)

    def lin(kw, kb, fan_in, fan_out):
        bound = 1.0 / jnp.sqrt(fan_in)
        w = jax.random.uniform(kw, (fan_in, fan_out), jnp.float32, -bound, bound)
        b = jax.random.uniform(kb, (1, fan_out), jnp.float32, -bound, bound)
        return w, b

    w1, b1 = lin(ks[0], ks[1], INPUT_DIM, HIDDEN_DIM)
    w2, b2 = lin(ks[2], ks[3], HIDDEN_DIM, OUTPUT_DIM)
    wq, bq = lin(ks[4], ks[5], OUTPUT_DIM, NUM_ACTIONS)
    return (w1, b1, w2, b2, wq, bq)


def dqn_reference(node_features, adjacency, params):
    """Plain-JAX reference implementing the PyTorch forward exactly (single graph)."""
    w1, b1, w2, b2, wq, bq = params
    h = jax.nn.relu(node_features @ w1 + b1.reshape(-1))
    h = adjacency.astype(jnp.float32) @ h
    h = jax.nn.relu(h @ w2 + b2.reshape(-1))
    emb = jnp.mean(h, axis=0)
    return emb @ wq + bq.reshape(-1)


def _make_inputs(k_nf, k_adj, batch):
    nf = jax.random.normal(k_nf, (batch, NUM_NODES, INPUT_DIM), jnp.float32)
    a = jax.random.uniform(k_adj, (batch, NUM_NODES, NUM_NODES), jnp.float32)
    a = (a + jnp.swapaxes(a, -1, -2)) * 0.5 + jnp.eye(NUM_NODES)
    adj = a / jnp.sum(a, axis=-1, keepdims=True)
    return nf, adj


if __name__ == "__main__":
    key = jax.random.PRNGKey(0)
    k_params, k_nf, k_adj, k_nf2, k_adj2 = jax.random.split(key, 5)
    params = init_params(k_params)
    ref_fn = jax.vmap(lambda nf, adj: dqn_reference(nf, adj, params))

    # small batch: exercises bt=8 with 2 grid steps
    nf16, adj16 = _make_inputs(k_nf, k_adj, 16)
    q16 = jax.block_until_ready(dqn_forward_batched(nf16, adj16, params))
    assert q16.shape == (16, NUM_ACTIONS)
    ref16 = ref_fn(nf16, adj16)
    assert jnp.allclose(q16, ref16, atol=1e-4, rtol=1e-4), (q16, ref16)

    # larger ragged batch: exercises the big-tile path + row padding (300 -> 2 x 152)
    nf300, adj300 = _make_inputs(k_nf2, k_adj2, 300)
    q300 = jax.block_until_ready(dqn_forward_batched(nf300, adj300, params))
    assert q300.shape == (300, NUM_ACTIONS)
    ref300 = ref_fn(nf300, adj300)
    assert jnp.allclose(q300, ref300, atol=1e-4, rtol=1e-4)

    # single-graph path (original PyTorch forward signature)
    q_single = jax.block_until_ready(dqn_forward(nf16[0], adj16[0], params))
    assert q_single.shape == (NUM_ACTIONS,)
    assert jnp.allclose(q_single, ref16[0], atol=1e-4, rtol=1e-4)

    print("KERNEL_OK")
</pallas_src>

<mosaic_0001>
module attributes {stable_mosaic.version = 11 : i64} {
  func.func @dqn_kernel(%arg0: i32, %arg1: memref<8x24xf32, #tpu.memory_space<vmem>>, %arg2: memref<8x64xf32, #tpu.memory_space<vmem>>, %arg3: memref<24x128xf32, #tpu.memory_space<vmem>>, %arg4: memref<1x128xf32, #tpu.memory_space<vmem>>, %arg5: memref<64x1024xf32, #tpu.memory_space<vmem>>, %arg6: memref<128x1024xf32, #tpu.memory_space<vmem>>, %arg7: memref<128x256xf32, #tpu.memory_space<vmem>>, %arg8: memref<1x256xf32, #tpu.memory_space<vmem>>, %arg9: memref<256x4xf32, #tpu.memory_space<vmem>>, %arg10: memref<1x4xf32, #tpu.memory_space<vmem>>, %arg11: memref<8x4xf32, #tpu.memory_space<vmem>>) attributes {dimension_semantics = [#tpu.dimension_semantics<parallel>], iteration_bounds = array<i64: 2>, scalar_prefetch = 0 : i64, scratch_operands = 0 : i64, tpu.core_type = #tpu.core_type<tc>, window_params = [{transform_indices = @transform_0, window_bounds = array<i64: 8, 24>}, {transform_indices = @transform_1, window_bounds = array<i64: 8, 64>}, {pipeline_mode = #tpu.pipeline_mode<synchronous>, transform_indices = @transform_2, window_bounds = array<i64: 24, 128>}, {pipeline_mode = #tpu.pipeline_mode<synchronous>, transform_indices = @transform_3, window_bounds = array<i64: 1, 128>}, {pipeline_mode = #tpu.pipeline_mode<synchronous>, transform_indices = @transform_4, window_bounds = array<i64: 64, 1024>}, {pipeline_mode = #tpu.pipeline_mode<synchronous>, transform_indices = @transform_5, window_bounds = array<i64: 128, 1024>}, {pipeline_mode = #tpu.pipeline_mode<synchronous>, transform_indices = @transform_6, window_bounds = array<i64: 128, 256>}, {pipeline_mode = #tpu.pipeline_mode<synchronous>, transform_indices = @transform_7, window_bounds = array<i64: 1, 256>}, {pipeline_mode = #tpu.pipeline_mode<synchronous>, transform_indices = @transform_8, window_bounds = array<i64: 256, 4>}, {pipeline_mode = #tpu.pipeline_mode<synchronous>, transform_indices = @transform_9, window_bounds = array<i64: 1, 4>}, {transform_indices = @transform_10, window_bounds = array<i64: 8, 4>}]} {
    %c0 = arith.constant 0 : index
    %c0_0 = arith.constant 0 : index
    %0 = vector.load %arg1[%c0, %c0_0] : memref<8x24xf32, #tpu.memory_space<vmem>>, vector<8x24xf32>
    %c0_1 = arith.constant 0 : index
    %c0_2 = arith.constant 0 : index
    %1 = vector.load %arg3[%c0_1, %c0_2] : memref<24x128xf32, #tpu.memory_space<vmem>>, vector<24x128xf32>
    %cst = arith.constant dense<0.000000e+00> : vector<8x128xf32>
    %2 = tpu.matmul %0, %1, %cst {dimension_numbers = #tpu.dot_dimension_numbers<[1], [0], [0], [1], [0, 0, 1, 1], [], []>} : vector<8x24xf32>, vector<24x128xf32>, vector<8x128xf32> -> vector<8x128xf32>
    %c0_3 = arith.constant 0 : index
    %c0_4 = arith.constant 0 : index
    %3 = vector.load %arg4[%c0_3, %c0_4] : memref<1x128xf32, #tpu.memory_space<vmem>>, vector<1x128xf32>
    %4 = vector.broadcast %3 : vector<1x128xf32> to vector<8x128xf32>
    %5 = arith.addf %2, %4 : vector<8x128xf32>
    %cst_5 = arith.constant 0.000000e+00 : f32
    %6 = vector.broadcast %cst_5 : f32 to vector<8x128xf32>
    %7 = arith.maximumf %5, %6 : vector<8x128xf32>
    %c0_6 = arith.constant 0 : index
    %c0_7 = arith.constant 0 : index
    %8 = vector.load %arg2[%c0_6, %c0_7] : memref<8x64xf32, #tpu.memory_space<vmem>>, vector<8x64xf32>
    %c0_8 = arith.constant 0 : index
    %c0_9 = arith.constant 0 : index
    %9 = vector.load %arg5[%c0_8, %c0_9] : memref<64x1024xf32, #tpu.memory_space<vmem>>, vector<64x1024xf32>
    %cst_10 = arith.constant dense<0.000000e+00> : vector<8x1024xf32>
    %10 = tpu.matmul %8, %9, %cst_10 {dimension_numbers = #tpu.dot_dimension_numbers<[1], [0], [0], [1], [0, 0, 1, 1], [], []>} : vector<8x64xf32>, vector<64x1024xf32>, vector<8x1024xf32> -> vector<8x1024xf32>
    %c0_11 = arith.constant 0 : index
    %c0_12 = arith.constant 0 : index
    %11 = vector.load %arg6[%c0_11, %c0_12] : memref<128x1024xf32, #tpu.memory_space<vmem>>, vector<128x1024xf32>
    %cst_13 = arith.constant dense<0.000000e+00> : vector<8x1024xf32>
    %12 = tpu.matmul %7, %11, %cst_13 {dimension_numbers = #tpu.dot_dimension_numbers<[1], [0], [0], [1], [0, 0, 1, 1], [], []>} : vector<8x128xf32>, vector<128x1024xf32>, vector<8x1024xf32> -> vector<8x1024xf32>
    %13 = arith.mulf %10, %12 : vector<8x1024xf32>
    %14 = vector.extract_strided_slice %13 {offsets = [0, 0], sizes = [8, 128], strides = [1, 1]} : vector<8x1024xf32> to vector<8x128xf32>
    %15 = vector.extract_strided_slice %13 {offsets = [0, 128], sizes = [8, 128], strides = [1, 1]} : vector<8x1024xf32> to vector<8x128xf32>
    %16 = arith.addf %14, %15 : vector<8x128xf32>
    %17 = vector.extract_strided_slice %13 {offsets = [0, 256], sizes = [8, 128], strides = [1, 1]} : vector<8x1024xf32> to vector<8x128xf32>
    %18 = arith.addf %16, %17 : vector<8x128xf32>
    %19 = vector.extract_strided_slice %13 {offsets = [0, 384], sizes = [8, 128], strides = [1, 1]} : vector<8x1024xf32> to vector<8x128xf32>
    %20 = arith.addf %18, %19 : vector<8x128xf32>
    %21 = vector.extract_strided_slice %13 {offsets = [0, 512], sizes = [8, 128], strides = [1, 1]} : vector<8x1024xf32> to vector<8x128xf32>
    %22 = arith.addf %20, %21 : vector<8x128xf32>
    %23 = vector.extract_strided_slice %13 {offsets = [0, 640], sizes = [8, 128], strides = [1, 1]} : vector<8x1024xf32> to vector<8x128xf32>
    %24 = arith.addf %22, %23 : vector<8x128xf32>
    %25 = vector.extract_strided_slice %13 {offsets = [0, 768], sizes = [8, 128], strides = [1, 1]} : vector<8x1024xf32> to vector<8x128xf32>
    %26 = arith.addf %24, %25 : vector<8x128xf32>
    %27 = vector.extract_strided_slice %13 {offsets = [0, 896], sizes = [8, 128], strides = [1, 1]} : vector<8x1024xf32> to vector<8x128xf32>
    %28 = arith.addf %26, %27 : vector<8x128xf32>
    %c0_14 = arith.constant 0 : index
    %c0_15 = arith.constant 0 : index
    %29 = vector.load %arg7[%c0_14, %c0_15] : memref<128x256xf32, #tpu.memory_space<vmem>>, vector<128x256xf32>
    %cst_16 = arith.constant dense<0.000000e+00> : vector<8x256xf32>
    %30 = tpu.matmul %28, %29, %cst_16 {dimension_numbers = #tpu.dot_dimension_numbers<[1], [0], [0], [1], [0, 0, 1, 1], [], []>} : vector<8x128xf32>, vector<128x256xf32>, vector<8x256xf32> -> vector<8x256xf32>
    %c0_17 = arith.constant 0 : index
    %c0_18 = arith.constant 0 : index
    %31 = vector.load %arg8[%c0_17, %c0_18] : memref<1x256xf32, #tpu.memory_space<vmem>>, vector<1x256xf32>
    %32 = vector.broadcast %31 : vector<1x256xf32> to vector<8x256xf32>
    %33 = arith.addf %30, %32 : vector<8x256xf32>
    %cst_19 = arith.constant 0.000000e+00 : f32
    %34 = vector.broadcast %cst_19 : f32 to vector<8x256xf32>
    %35 = arith.maximumf %33, %34 : vector<8x256xf32>
    %c0_20 = arith.constant 0 : index
    %c0_21 = arith.constant 0 : index
    %36 = vector.load %arg9[%c0_20, %c0_21] : memref<256x4xf32, #tpu.memory_space<vmem>>, vector<256x4xf32>
    %cst_22 = arith.constant dense<0.000000e+00> : vector<8x4xf32>
    %37 = tpu.matmul %35, %36, %cst_22 {dimension_numbers = #tpu.dot_dimension_numbers<[1], [0], [0], [1], [0, 0, 1, 1], [], []>} : vector<8x256xf32>, vector<256x4xf32>, vector<8x4xf32> -> vector<8x4xf32>
    %c0_23 = arith.constant 0 : index
    %c0_24 = arith.constant 0 : index
    %38 = vector.load %arg10[%c0_23, %c0_24] : memref<1x4xf32, #tpu.memory_space<vmem>>, vector<1x4xf32>
    %39 = vector.broadcast %38 : vector<1x4xf32> to vector<8x4xf32>
    %40 = arith.addf %37, %39 : vector<8x4xf32>
    %c0_25 = arith.constant 0 : index
    %c0_26 = arith.constant 0 : index
    %41 = vector.load %arg11[%c0_25, %c0_26] : memref<8x4xf32, #tpu.memory_space<vmem>>, vector<8x4xf32>
    tpu.vector_store %arg11[%c0_25, %c0_26], %40 {strides = array<i32>} : memref<8x4xf32, #tpu.memory_space<vmem>>, vector<8x4xf32>,
    return
  }
  func.func @transform_0(%arg0: i32) -> (i32, i32) {
    %c0_i32 = arith.constant 0 : i32
    %c0_i32_0 = arith.constant 0 : i32
    return %arg0, %c0_i32 : i32, i32
  }
  func.func @transform_1(%arg0: i32) -> (i32, i32) {
    %c0_i32 = arith.constant 0 : i32
    %c0_i32_0 = arith.constant 0 : i32
    return %arg0, %c0_i32 : i32, i32
  }
  func.func @transform_2(%arg0: i32) -> (i32, i32) {
    %c0_i32 = arith.constant 0 : i32
    %c0_i32_0 = arith.constant 0 : i32
    %c0_i32_1 = arith.constant 0 : i32
    return %c0_i32, %c0_i32_0 : i32, i32
  }
  func.func @transform_3(%arg0: i32) -> (i32, i32) {
    %c0_i32 = arith.constant 0 : i32
    %c0_i32_0 = arith.constant 0 : i32
    %c0_i32_1 = arith.constant 0 : i32
    return %c0_i32, %c0_i32_0 : i32, i32
  }
  func.func @transform_4(%arg0: i32) -> (i32, i32) {
    %c0_i32 = arith.constant 0 : i32
    %c0_i32_0 = arith.constant 0 : i32
    %c0_i32_1 = arith.constant 0 : i32
    return %c0_i32, %c0_i32_0 : i32, i32
  }
  func.func @transform_5(%arg0: i32) -> (i32, i32) {
    %c0_i32 = arith.constant 0 : i32
    %c0_i32_0 = arith.constant 0 : i32
    %c0_i32_1 = arith.constant 0 : i32
    return %c0_i32, %c0_i32_0 : i32, i32
  }
  func.func @transform_6(%arg0: i32) -> (i32, i32) {
    %c0_i32 = arith.constant 0 : i32
    %c0_i32_0 = arith.constant 0 : i32
    %c0_i32_1 = arith.constant 0 : i32
    return %c0_i32, %c0_i32_0 : i32, i32
  }
  func.func @transform_7(%arg0: i32) -> (i32, i32) {
    %c0_i32 = arith.constant 0 : i32
    %c0_i32_0 = arith.constant 0 : i32
    %c0_i32_1 = arith.constant 0 : i32
    return %c0_i32, %c0_i32_0 : i32, i32
  }
  func.func @transform_8(%arg0: i32) -> (i32, i32) {
    %c0_i32 = arith.constant 0 : i32
    %c0_i32_0 = arith.constant 0 : i32
    %c0_i32_1 = arith.constant 0 : i32
    return %c0_i32, %c0_i32_0 : i32, i32
  }
  func.func @transform_9(%arg0: i32) -> (i32, i32) {
    %c0_i32 = arith.constant 0 : i32
    %c0_i32_0 = arith.constant 0 : i32
    %c0_i32_1 = arith.constant 0 : i32
    return %c0_i32, %c0_i32_0 : i32, i32
  }
  func.func @transform_10(%arg0: i32) -> (i32, i32) {
    %c0_i32 = arith.constant 0 : i32
    %c0_i32_0 = arith.constant 0 : i32
    return %arg0, %c0_i32 : i32, i32
  }
}

</mosaic_0001>

<llo_original>
// kernel: tpu_custom_call.1
$region0: #{tpu_custom_call.1}
  #allocation0 [shape = 'u32[]', space=smem, size = 0x4, offset = 0x4, fixed_abs, tag = 'smem constant byte address 0x4 - core index']
  #allocation1 [shape = 'u32[144,128]{1,0:T(1,128)}', space=vmem, size = 0x12000, scoped, tag = 'internal scratch']
  %s0 = inlined_call_operand.vmem [shape: f32[16,24], index: 0, kind: input, shape index: {}]
  %s1 = inlined_call_operand.hbm [shape: f32[16,64], index: 1, kind: input, shape index: {}]
  %s2 = inlined_call_operand.hbm [shape: f32[24,128], index: 2, kind: input, shape index: {}]
  %s3 = inlined_call_operand.hbm [shape: f32[1,128], index: 3, kind: input, shape index: {}]
  %s4 = inlined_call_operand.hbm [shape: f32[64,1024], index: 4, kind: input, shape index: {}]
  %s5 = inlined_call_operand.hbm [shape: f32[128,1024], index: 5, kind: input, shape index: {}]
  %s6 = inlined_call_operand.vmem [shape: f32[128,256], index: 6, kind: input, shape index: {}]
  %s7 = inlined_call_operand.vmem [shape: f32[1,256], index: 7, kind: input, shape index: {}]
  %s8 = inlined_call_operand.vmem [shape: f32[256,4], index: 8, kind: input, shape index: {}]
  %s9 = inlined_call_operand.vmem [shape: f32[1,4], index: 9, kind: input, shape index: {}]
  %s10 = inlined_call_operand.vmem [shape: f32[16,4], index: 10, kind: output, shape index: {}]
  %s11 = sld [smem:[#allocation0]]
  $region93: #{tpu_custom_call.1} parent=0
    _
  %s13 = ssub.s32 1, %s11
  %s14 = scalar_select 0, %s13, %s11
  $region1: #{tpu_custom_call.1} parent=0
    #allocation2 [shape = 'u8[8192]{0}', space=vmem, size = 0x2000, scoped, tag = 'input window, operand 1']
    #allocation3 [shape = 's32[2]{0}', space=sflag, size = 0x8, scoped, tag = 'scoped memory for tpu_custom_call.1']
    #allocation4 [shape = 'u8[12288]{0}', space=vmem, size = 0x3000, scoped, tag = 'input window, operand 2, single buffered']
    #allocation5 [shape = 's32[1]{0}', space=sflag, size = 0x4, scoped, tag = 'scoped memory for tpu_custom_call.1']
    #allocation6 [shape = 'u8[512]{0}', space=vmem, size = 0x400, scoped, tag = 'input window, operand 3, single buffered']
    #allocation7 [shape = 'u8[262144]{0}', space=vmem, size = 0x40000, scoped, tag = 'input window, operand 4, single buffered']
    #allocation8 [shape = 's32[1]{0}', space=sflag, size = 0x4, scoped, tag = 'scoped memory for tpu_custom_call.1']
    #allocation9 [shape = 'u8[524288]{0}', space=vmem, size = 0x80000, scoped, tag = 'input window, operand 5, single buffered']
    %15 = vsyncpa [#allocation3], 0
    %s16 = scalar_lea.sflag [#allocation3], 1
    %17 = vsyncpa %s16, 0
    %18 = vsyncpa [#allocation5], 0
    %19 = vsyncpa [#allocation8], 0
    loop: start=0, step=1, limit=4
    $region2: #{tpu_custom_call.1} parent=1 // loop_pre_header
      _
    $region3: #{tpu_custom_call.1} parent=1 // loop_header
      %s21 = sphi 0, %s25
      %p22 = scmp.ge.s32.totalorder %s21, 4
      %s31 = sphi 0, %s33
      %s34 = sphi 0, %s31
      %s35 = sphi 0, %s34
      %s51 = sphi 0, %s35
      %s57 = sphi 0, %s59
      %s60 = sphi 0, %s57
      %s61 = sphi 0, %s60
      %s77 = sphi 0, %s61
      %s81 = sphi 0, %s81
      %s83 = sphi 0, %s81
      %s84 = sphi 0, %s83
      %s98 = sphi 0, %s84
      %s102 = sphi 0, %s102
      %s104 = sphi 0, %s102
      %s105 = sphi 0, %s104
      %s119 = sphi 0, %s105
      %s123 = sphi 0, %s123
      %s125 = sphi 0, %s123
      %s126 = sphi 0, %s125
      %s140 = sphi 0, %s126
      %s144 = sphi 0, %s144
      %s146 = sphi 0, %s144
      %s147 = sphi 0, %s146
      %s161 = sphi 0, %s147
      %s165 = sphi 0, %s165
      %s167 = sphi 0, %s165
      %s168 = sphi 0, %s167
      %s182 = sphi 0, %s168
      %s186 = sphi 0, %s186
      %s188 = sphi 0, %s186
      %s189 = sphi 0, %s188
      %s203 = sphi 0, %s189
      %s207 = sphi 0, %s207
      %s209 = sphi 0, %s207
      %s210 = sphi 0, %s209
      %s224 = sphi 0, %s210
      %s228 = sphi 0, %s228
      %s230 = sphi 0, %s228
      %s231 = sphi 0, %s230
      %s245 = sphi 0, %s231
      %s251 = sphi 0, %s253
      %s254 = sphi 0, %s251
      %s255 = sphi 0, %s254
      %s271 = sphi 0, %s255
    $region4: #{tpu_custom_call.1} parent=1 // loop_header_branch
      %24 = sbr.rel (%p22) target = $region8
    $region5: #{tpu_custom_call.1} parent=1 // loop_body
      %s26 = ssub.s32 %s21, 1
      %s27 = ssub.s32 %s21, 2
      %s28 = sadd.s32 %s21, 1
      %s29 = ssub.s32 %s21, %s28
      %p30 = scmp.eq.s32.totalorder %s29, 0
      %s32 = sadd.s32 %s31, 1
      %s33 = scalar_select %p30, %s31, %s32
      %p36 = pneg %p30
      %p37 = scmp.eq.s32.totalorder %s21, 1
      %p38 = por %p36, %p37
      %p39 = scmp.ne.s32.totalorder %s31, %s34
      %p40 = scmp.eq.s32.totalorder %s21, 0
      %p41 = por %p39, %p40
      %p42 = scmp.ne.s32.totalorder %s31, %s34
      %p43 = scmp.eq.s32.totalorder %s26, 1
      %p44 = por %p42, %p43
      %p45 = scmp.ne.s32.totalorder %s34, %s35
      %p46 = scmp.eq.s32.totalorder %s26, 0
      %p47 = por %p45, %p46
      %p48 = scmp.ne.s32.totalorder %s34, %s35
      %p49 = scmp.eq.s32.totalorder %s27, 1
      %p50 = por %p48, %p49
      %p52 = scmp.ne.s32.totalorder %s35, %s51
      %p53 = scmp.eq.s32.totalorder %s27, 0
      %p54 = por %p52, %p53
      %s55 = ssub.s32 %s21, %s28
      %p56 = scmp.eq.s32.totalorder %s55, 0
      %s58 = sadd.s32 %s57, 1
      %s59 = scalar_select %p56, %s57, %s58
      %p62 = pneg %p56
      %p63 = scmp.eq.s32.totalorder %s21, 1
      %p64 = por %p62, %p63
      %p65 = scmp.ne.s32.totalorder %s57, %s60
      %p66 = scmp.eq.s32.totalorder %s21, 0
      %p67 = por %p65, %p66
      %p68 = scmp.ne.s32.totalorder %s57, %s60
      %p69 = scmp.eq.s32.totalorder %s26, 1
      %p70 = por %p68, %p69
      %p71 = scmp.ne.s32.totalorder %s60, %s61
      %p72 = scmp.eq.s32.totalorder %s26, 0
      %p73 = por %p71, %p72
      %p74 = scmp.ne.s32.totalorder %s60, %s61
      %p75 = scmp.eq.s32.totalorder %s27, 1
      %p76 = por %p74, %p75
      %p78 = scmp.ne.s32.totalorder %s61, %s77
      %p79 = scmp.eq.s32.totalorder %s27, 0
      %p80 = por %p78, %p79
      %s82 = sadd.s32 %s81, 1
      %p85 = scmp.eq.s32.totalorder %s21, 1
      %p86 = scmp.ne.s32.totalorder %s81, %s83
      %p87 = scmp.eq.s32.totalorder %s21, 0
      %p88 = por %p86, %p87
      %p89 = scmp.ne.s32.totalorder %s81, %s83
      %p90 = scmp.eq.s32.totalorder %s26, 1
      %p91 = por %p89, %p90
      %p92 = scmp.ne.s32.totalorder %s83, %s84
      %p93 = scmp.eq.s32.totalorder %s26, 0
      %p94 = por %p92, %p93
      %p95 = scmp.ne.s32.totalorder %s83, %s84
      %p96 = scmp.eq.s32.totalorder %s27, 1
      %p97 = por %p95, %p96
      %p99 = scmp.ne.s32.totalorder %s84, %s98
      %p100 = scmp.eq.s32.totalorder %s27, 0
      %p101 = por %p99, %p100
      %s103 = sadd.s32 %s102, 1
      %p106 = scmp.eq.s32.totalorder %s21, 1
      %p107 = scmp.ne.s32.totalorder %s102, %s104
      %p108 = scmp.eq.s32.totalorder %s21, 0
      %p109 = por %p107, %p108
      %p110 = scmp.ne.s32.totalorder %s102, %s104
      %p111 = scmp.eq.s32.totalorder %s26, 1
      %p112 = por %p110, %p111
      %p113 = scmp.ne.s32.totalorder %s104, %s105
      %p114 = scmp.eq.s32.totalorder %s26, 0
      %p115 = por %p113, %p114
      %p116 = scmp.ne.s32.totalorder %s104, %s105
      %p117 = scmp.eq.s32.totalorder %s27, 1
      %p118 = por %p116, %p117
      %p120 = scmp.ne.s32.totalorder %s105, %s119
      %p121 = scmp.eq.s32.totalorder %s27, 0
      %p122 = por %p120, %p121
      %s124 = sadd.s32 %s123, 1
      %p127 = scmp.eq.s32.totalorder %s21, 1
      %p128 = scmp.ne.s32.totalorder %s123, %s125
      %p129 = scmp.eq.s32.totalorder %s21, 0
      %p130 = por %p128, %p129
      %p131 = scmp.ne.s32.totalorder %s123, %s125
      %p132 = scmp.eq.s32.totalorder %s26, 1
      %p133 = por %p131, %p132
      %p134 = scmp.ne.s32.totalorder %s125, %s126
      %p135 = scmp.eq.s32.totalorder %s26, 0
      %p136 = por %p134, %p135
      %p137 = scmp.ne.s32.totalorder %s125, %s126
      %p138 = scmp.eq.s32.totalorder %s27, 1
      %p139 = por %p137, %p138
      %p141 = scmp.ne.s32.totalorder %s126, %s140
      %p142 = scmp.eq.s32.totalorder %s27, 0
      %p143 = por %p141, %p142
      %s145 = sadd.s32 %s144, 1
      %p148 = scmp.eq.s32.totalorder %s21, 1
      %p149 = scmp.ne.s32.totalorder %s144, %s146
      %p150 = scmp.eq.s32.totalorder %s21, 0
      %p151 = por %p149, %p150
      %p152 = scmp.ne.s32.totalorder %s144, %s146
      %p153 = scmp.eq.s32.totalorder %s26, 1
      %p154 = por %p152, %p153
      %p155 = scmp.ne.s32.totalorder %s146, %s147
      %p156 = scmp.eq.s32.totalorder %s26, 0
      %p157 = por %p155, %p156
      %p158 = scmp.ne.s32.totalorder %s146, %s147
      %p159 = scmp.eq.s32.totalorder %s27, 1
      %p160 = por %p158, %p159
      %p162 = scmp.ne.s32.totalorder %s147, %s161
      %p163 = scmp.eq.s32.totalorder %s27, 0
      %p164 = por %p162, %p163
      %s166 = sadd.s32 %s165, 1
      %p169 = scmp.eq.s32.totalorder %s21, 1
      %p170 = scmp.ne.s32.totalorder %s165, %s167
      %p171 = scmp.eq.s32.totalorder %s21, 0
      %p172 = por %p170, %p171
      %p173 = scmp.ne.s32.totalorder %s165, %s167
      %p174 = scmp.eq.s32.totalorder %s26, 1
      %p175 = por %p173, %p174
      %p176 = scmp.ne.s32.totalorder %s167, %s168
      %p177 = scmp.eq.s32.totalorder %s26, 0
      %p178 = por %p176, %p177
      %p179 = scmp.ne.s32.totalorder %s167, %s168
      %p180 = scmp.eq.s32.totalorder %s27, 1
      %p181 = por %p179, %p180
      %p183 = scmp.ne.s32.totalorder %s168, %s182
      %p184 = scmp.eq.s32.totalorder %s27, 0
      %p185 = por %p183, %p184
      %s187 = sadd.s32 %s186, 1
      %p190 = scmp.eq.s32.totalorder %s21, 1
      %p191 = scmp.ne.s32.totalorder %s186, %s188
      %p192 = scmp.eq.s32.totalorder %s21, 0
      %p193 = por %p191, %p192
      %p194 = scmp.ne.s32.totalorder %s186, %s188
      %p195 = scmp.eq.s32.totalorder %s26, 1
      %p196 = por %p194, %p195
      %p197 = scmp.ne.s32.totalorder %s188, %s189
      %p198 = scmp.eq.s32.totalorder %s26, 0
      %p199 = por %p197, %p198
      %p200 = scmp.ne.s32.totalorder %s188, %s189
      %p201 = scmp.eq.s32.totalorder %s27, 1
      %p202 = por %p200, %p201
      %p204 = scmp.ne.s32.totalorder %s189, %s203
      %p205 = scmp.eq.s32.totalorder %s27, 0
      %p206 = por %p204, %p205
      %s208 = sadd.s32 %s207, 1
      %p211 = scmp.eq.s32.totalorder %s21, 1
      %p212 = scmp.ne.s32.totalorder %s207, %s209
      %p213 = scmp.eq.s32.totalorder %s21, 0
      %p214 = por %p212, %p213
      %p215 = scmp.ne.s32.totalorder %s207, %s209
      %p216 = scmp.eq.s32.totalorder %s26, 1
      %p217 = por %p215, %p216
      %p218 = scmp.ne.s32.totalorder %s209, %s210
      %p219 = scmp.eq.s32.totalorder %s26, 0
      %p220 = por %p218, %p219
      %p221 = scmp.ne.s32.totalorder %s209, %s210
      %p222 = scmp.eq.s32.totalorder %s27, 1
      %p223 = por %p221, %p222
      %p225 = scmp.ne.s32.totalorder %s210, %s224
      %p226 = scmp.eq.s32.totalorder %s27, 0
      %p227 = por %p225, %p226
      %s229 = sadd.s32 %s228, 1
      %p232 = scmp.eq.s32.totalorder %s21, 1
      %p233 = scmp.ne.s32.totalorder %s228, %s230
      %p234 = scmp.eq.s32.totalorder %s21, 0
      %p235 = por %p233, %p234
      %p236 = scmp.ne.s32.totalorder %s228, %s230
      %p237 = scmp.eq.s32.totalorder %s26, 1
      %p238 = por %p236, %p237
      %p239 = scmp.ne.s32.totalorder %s230, %s231
      %p240 = scmp.eq.s32.totalorder %s26, 0
      %p241 = por %p239, %p240
      %p242 = scmp.ne.s32.totalorder %s230, %s231
      %p243 = scmp.eq.s32.totalorder %s27, 1
      %p244 = por %p242, %p243
      %p246 = scmp.ne.s32.totalorder %s231, %s245
      %p247 = scmp.eq.s32.totalorder %s27, 0
      %p248 = por %p246, %p247
      %s249 = ssub.s32 %s21, %s28
      %p250 = scmp.eq.s32.totalorder %s249, 0
      %s252 = sadd.s32 %s251, 1
      %s253 = scalar_select %p250, %s251, %s252
      %p256 = pneg %p250
      %p257 = scmp.eq.s32.totalorder %s21, 1
      %p258 = por %p256, %p257
      %p259 = scmp.ne.s32.totalorder %s251, %s254
      %p260 = scmp.eq.s32.totalorder %s21, 0
      %p261 = por %p259, %p260
      %p262 = scmp.ne.s32.totalorder %s251, %s254
      %p263 = scmp.eq.s32.totalorder %s26, 1
      %p264 = por %p262, %p263
      %p265 = scmp.ne.s32.totalorder %s254, %s255
      %p266 = scmp.eq.s32.totalorder %s26, 0
      %p267 = por %p265, %p266
      %p268 = scmp.ne.s32.totalorder %s254, %s255
      %p269 = scmp.eq.s32.totalorder %s27, 1
      %p270 = por %p268, %p269
      %p272 = scmp.ne.s32.totalorder %s255, %s271
      %p273 = scmp.eq.s32.totalorder %s27, 0
      %p274 = por %p272, %p273
      %p275 = scmp.le.s32.totalorder 1, %s21
      %p276 = scmp.lt.s32.totalorder %s21, 3
      %p277 = pnand %p275, %p276
      %p278 = pneg %p277
      // Predicated region
      $region9: #{tpu_custom_call.1} parent=5 // pred_check
        _
      $region10: #{tpu_custom_call.1} parent=5 // pred_check_branch
        %280 = sbr.rel (%p277) target = $region12
      $region11: #{tpu_custom_call.1} parent=5 // pred_region
        %s281 = ssub.s32 %s21, 1
        // Predicated region
        $region13: #{tpu_custom_call.1} parent=11 // pred_check
          %p282 = pneg %p94
        $region14: #{tpu_custom_call.1} parent=11 // pred_check_branch
          %284 = sbr.rel (%p282) target = $region16
        $region15: #{tpu_custom_call.1} parent=11 // pred_region
          %s286 = ssub.s32 384, 384
          %287 = vsyncadd [#allocation5], %s286
          %s288 = sshll.u32 [#allocation4], 4
          %s289 = int_to_ptr.vmem [resolvable:$true] %s288
          %294 = dma.hbm_to_vmem [thread:$0]  %s2, 384, %s289, [#allocation5], 128, 128, 8
        $region16: #{tpu_custom_call.1} parent=11 // pred_fallthru
          _
        // Predicated region
        $region17: #{tpu_custom_call.1} parent=11 // pred_check
          %p295 = pneg %p115
        $region18: #{tpu_custom_call.1} parent=11 // pred_check_branch
          %297 = sbr.rel (%p295) target = $region20
        $region19: #{tpu_custom_call.1} parent=11 // pred_region
          %s299 = ssub.s32 16, 16
          %300 = vsyncadd [#allocation5], %s299
          %s302 = sshll.u32 [#allocation6], 4
          %s303 = int_to_ptr.vmem [resolvable:$true] %s302
          %305 = dma.hbm_to_vmem [thread:$0]  %s3, 16, %s303, [#allocation5]
        $region20: #{tpu_custom_call.1} parent=11 // pred_fallthru
          _
        // Predicated region
        $region21: #{tpu_custom_call.1} parent=11 // pred_check
          %p306 = pneg %p136
        $region22: #{tpu_custom_call.1} parent=11 // pred_check_branch
          %308 = sbr.rel (%p306) target = $region24
        $region23: #{tpu_custom_call.1} parent=11 // pred_region
          %s310 = ssub.s32 8192, 8192
          %311 = vsyncadd [#allocation8], %s310
          %s312 = sshll.u32 [#allocation7], 4
          %s313 = int_to_ptr.vmem [resolvable:$true] %s312
          %318 = dma.hbm_to_vmem [thread:$0]  %s4, 8192, %s313, [#allocation8], 1024, 1024, 64
        $region24: #{tpu_custom_call.1} parent=11 // pred_fallthru
          _
        // Predicated region
        $region25: #{tpu_custom_call.1} parent=11 // pred_check
          %p319 = pneg %p157
        $region26: #{tpu_custom_call.1} parent=11 // pred_check_branch
          %321 = sbr.rel (%p319) target = $region28
        $region27: #{tpu_custom_call.1} parent=11 // pred_region
          %s323 = ssub.s32 16384, 16384
          %324 = vsyncadd [#allocation8], %s323
          %s325 = sshll.u32 [#allocation9], 4
          %s326 = int_to_ptr.vmem [resolvable:$true] %s325
          %331 = dma.hbm_to_vmem [thread:$0]  %s5, 16384, %s326, [#allocation8], 1024, 1024, 64
        $region28: #{tpu_custom_call.1} parent=11 // pred_fallthru
          _
        // Predicated region
        $region29: #{tpu_custom_call.1} parent=11 // pred_check
          %p332 = pneg %p178
        $region30: #{tpu_custom_call.1} parent=11 // pred_check_branch
          %334 = sbr.rel (%p332) target = $region32
        $region31: #{tpu_custom_call.1} parent=11 // pred_region
          _
        $region32: #{tpu_custom_call.1} parent=11 // pred_fallthru
          _
        // Predicated region
        $region33: #{tpu_custom_call.1} parent=11 // pred_check
          %p335 = pneg %p199
        $region34: #{tpu_custom_call.1} parent=11 // pred_check_branch
          %337 = sbr.rel (%p335) target = $region36
        $region35: #{tpu_custom_call.1} parent=11 // pred_region
          _
        $region36: #{tpu_custom_call.1} parent=11 // pred_fallthru
          _
        // Predicated region
        $region37: #{tpu_custom_call.1} parent=11 // pred_check
          %p338 = pneg %p220
        $region38: #{tpu_custom_call.1} parent=11 // pred_check_branch
          %340 = sbr.rel (%p338) target = $region40
        $region39: #{tpu_custom_call.1} parent=11 // pred_region
          _
        $region40: #{tpu_custom_call.1} parent=11 // pred_fallthru
          _
        // Predicated region
        $region41: #{tpu_custom_call.1} parent=11 // pred_check
          %p341 = pneg %p241
        $region42: #{tpu_custom_call.1} parent=11 // pred_check_branch
          %343 = sbr.rel (%p341) target = $region44
        $region43: #{tpu_custom_call.1} parent=11 // pred_region
          _
        $region44: #{tpu_custom_call.1} parent=11 // pred_fallthru
          _
      $region12: #{tpu_custom_call.1} parent=5 // pred_fallthru
        _
      %p344 = scmp.lt.s32.totalorder %s21, 2
      // Predicated region
      $region45: #{tpu_custom_call.1} parent=5 // pred_check
        %p345 = pneg %p344
      $region46: #{tpu_custom_call.1} parent=5 // pred_check_branch
        %347 = sbr.rel (%p345) target = $region48
      $region47: #{tpu_custom_call.1} parent=5 // pred_region
        // Predicated region
        $region49: #{tpu_custom_call.1} parent=47 // pred_check
          %p348 = pneg %p41
        $region50: #{tpu_custom_call.1} parent=47 // pred_check_branch
          %350 = sbr.rel (%p348) target = $region52
        $region51: #{tpu_custom_call.1} parent=47 // pred_region
          %p351 = scmp.lt.s32.totalorder %s21, 1
          %s352 = scalar_select %p351, %s21, 1
          %s353 = smul.addr %s352, 8
          %s354 = scalar_lea.vmem %s0, %s353
        $region52: #{tpu_custom_call.1} parent=47 // pred_fallthru
          _
        // Predicated region
        $region53: #{tpu_custom_call.1} parent=47 // pred_check
          %p355 = pneg %p67
        $region54: #{tpu_custom_call.1} parent=47 // pred_check_branch
          %357 = sbr.rel (%p355) target = $region56
        $region55: #{tpu_custom_call.1} parent=47 // pred_region
          %s358 = sand.u32 %s57, 1
          %s359 = scalar_lea.sflag [#allocation3], %s358
          %s360 = sand.u32 %s57, 1
          %s361 = smul.addr %s360, 8
          %s362 = scalar_lea.vmem [#allocation2], %s361
          %s364 = ssub.s32 128, 128
          %365 = vsyncadd %s359, %s364
          %s366 = smul.addr %s21, 128
          %s367 = scalar_lea.hbm %s1, %s366
          %s369 = sshll.u32 %s362, 4
          %s370 = int_to_ptr.vmem [resolvable:$true] %s369
          %372 = dma.hbm_to_vmem [thread:$0]  %s367, 128, %s370, %s359
        $region56: #{tpu_custom_call.1} parent=47 // pred_fallthru
          _
      $region48: #{tpu_custom_call.1} parent=5 // pred_fallthru
        _
      %p373 = scmp.le.s32.totalorder 1, %s21
      %p374 = scmp.lt.s32.totalorder %s21, 3
      %p375 = pnand %p373, %p374
      %p376 = pneg %p375
      // Predicated region
      $region57: #{tpu_custom_call.1} parent=5 // pred_check
        _
      $region58: #{tpu_custom_call.1} parent=5 // pred_check_branch
        %378 = sbr.rel (%p375) target = $region60
      $region59: #{tpu_custom_call.1} parent=5 // pred_region
        %s379 = ssub.s32 %s21, 1
        %s380 = sand.u32 %s60, 1
        %s381 = scalar_lea.sflag [#allocation3], %s380
        %s382 = sand.u32 %s60, 1
        %s383 = smul.addr %s382, 8
        %s384 = scalar_lea.vmem [#allocation2], %s383
        // Predicated region
        $region61: #{tpu_custom_call.1} parent=59 // pred_check
          %p385 = pneg %p73
        $region62: #{tpu_custom_call.1} parent=59 // pred_check_branch
          %387 = sbr.rel (%p385) target = $region64
        $region63: #{tpu_custom_call.1} parent=59 // pred_region
          %388 = dma.done %s381, 128
        $region64: #{tpu_custom_call.1} parent=59 // pred_fallthru
          _
        // Predicated region
        $region65: #{tpu_custom_call.1} parent=59 // pred_check
          %p389 = pneg %p94
        $region66: #{tpu_custom_call.1} parent=59 // pred_check_branch
          %391 = sbr.rel (%p389) target = $region68
        $region67: #{tpu_custom_call.1} parent=59 // pred_region
          %392 = dma.done [#allocation5], 384
        $region68: #{tpu_custom_call.1} parent=59 // pred_fallthru
          _
        // Predicated region
        $region69: #{tpu_custom_call.1} parent=59 // pred_check
          %p393 = pneg %p115
        $region70: #{tpu_custom_call.1} parent=59 // pred_check_branch
          %395 = sbr.rel (%p393) target = $region72
        $region71: #{tpu_custom_call.1} parent=59 // pred_region
          %396 = dma.done [#allocation5], 16
        $region72: #{tpu_custom_call.1} parent=59 // pred_fallthru
          _
        // Predicated region
        $region73: #{tpu_custom_call.1} parent=59 // pred_check
          %p397 = pneg %p136
        $region74: #{tpu_custom_call.1} parent=59 // pred_check_branch
          %399 = sbr.rel (%p397) target = $region76
        $region75: #{tpu_custom_call.1} parent=59 // pred_region
          %400 = dma.done [#allocation8], 8192
        $region76: #{tpu_custom_call.1} parent=59 // pred_fallthru
          _
        // Predicated region
        $region77: #{tpu_custom_call.1} parent=59 // pred_check
          %p401 = pneg %p157
        $region78: #{tpu_custom_call.1} parent=59 // pred_check_branch
          %403 = sbr.rel (%p401) target = $region80
        $region79: #{tpu_custom_call.1} parent=59 // pred_region
          %404 = dma.done [#allocation8], 16384
        $region80: #{tpu_custom_call.1} parent=59 // pred_fallthru
          _
        %p405 = scmp.lt.s32.totalorder %s26, 1
        %s406 = scalar_select %p405, %s26, 1
        %s407 = smul.addr %s406, 8
        %s408 = scalar_lea.vmem %s0, %s407
        %p409 = pneg %p47
        %p410 = pneg %p44
        %s411 = sand.u32 %s60, 1
        %s412 = scalar_lea.sflag [#allocation3], %s411
        %s413 = sand.u32 %s60, 1
        %s414 = smul.addr %s413, 8
        %s415 = scalar_lea.vmem [#allocation2], %s414
        %p416 = pneg %p73
        %p417 = pneg %p70
        %p418 = pneg %p94
        %p419 = pneg %p91
        %p420 = pneg %p115
        %p421 = pneg %p112
        %p422 = pneg %p136
        %p423 = pneg %p133
        %p424 = pneg %p157
        %p425 = pneg %p154
        %p426 = pneg %p178
        %p427 = pneg %p175
        %p428 = pneg %p199
        %p429 = pneg %p196
        %p430 = pneg %p220
        %p431 = pneg %p217
        %p432 = pneg %p241
        %p433 = pneg %p238
        %p434 = pneg %p267
        %p435 = pneg %p264
        %p436 = scmp.lt.s32.totalorder %s26, 1
        %s437 = scalar_select %p436, %s26, 1
        %s438 = smul.addr %s437, 8
        %s439 = scalar_lea.vmem %s10, %s438
        %p440 = scmp.lt.s32.totalorder %s26, 1
        %s441 = scalar_select %p440, %s26, 1
        %s442 = smul.addr %s441, 8
        %s443 = scalar_lea.vmem %s0, %s442
        %p444 = scmp.lt.s32.totalorder %s26, 1
        %s445 = scalar_select %p444, %s26, 1
        %s446 = smul.addr %s445, 8
        %s447 = scalar_lea.vmem %s10, %s446
        %v448 = vld [vmem:[%s443] sm:$0xff]
        %v449 = vld [vmem:[#allocation4] sm:$0xff]
        %v450 = vld [vmem:[#allocation4 + $0x8] sm:$0xff]
        %v451 = vld [vmem:[#allocation4 + $0x10] sm:$0xff]
        %v452 = vld [vmem:[#allocation6] sm:$0x1]
        %v454 = vlaneseq
        %v455 = vshrl.u32 %v454, 7
        %v456 = vsub.s32 0, %v455
        %v457 = vrot.slane %v452, %v456
        %vm459 = vcmask 195584
        %v461 = vsel %vm459, %v448, 0
        %463 = vmatprep.subr.mxu0 0.0
        %464 = vmatpush1.msra.mxu0 0.0
        %465 = vmatprep.subr.mxu0 0.0
        %466 = vmatpush1.msra.mxu0 0.0
        %467 = vmatprep.subr.mxu0 0.0
        %468 = vmatpush1.msra.mxu0 0.0
        %469 = vmatprep.subr.mxu0 0.0
        %470 = vmatpush1.msra.mxu0 0.0
        %471 = vmatprep.subr.mxu0 0.0
        %472 = vmatpush1.msra.mxu0 0.0
        %473 = vmatprep.subr.mxu0 0.0
        %474 = vmatpush1.msra.mxu0 0.0
        %475 = vmatprep.subr.mxu0 0.0
        %476 = vmatpush1.msra.mxu0 0.0
        %477 = vmatprep.subr.mxu0 0.0
        %478 = vmatpush1.msra.mxu0 0.0
        %479 = vmatprep.subr.mxu0 0.0
        %480 = vmatpush1.msra.mxu0 0.0
        %481 = vmatprep.subr.mxu0 0.0
        %482 = vmatpush1.msra.mxu0 0.0
        %483 = vmatprep.subr.mxu0 0.0
        %484 = vmatpush1.msra.mxu0 0.0
        %485 = vmatprep.subr.mxu0 0.0
        %486 = vmatpush1.msra.mxu0 0.0
        %487 = vmatprep.subr.mxu0 0.0
        %488 = vmatpush1.msra.mxu0 0.0
        %489 = vmatprep.subr.mxu0 0.0
        %490 = vmatpush1.msra.mxu0 %v451
        %491 = vmatprep.subr.mxu0 0.0
        %492 = vmatpush1.msra.mxu0 %v450
        %493 = vmatprep.subr.mxu0 0.0
        %494 = vmatpush1.msra.mxu0 %v449
        %495 = vmatprep.subr.mxu0 0.0
        %496 = vmatpush2.msra.mxu0 0.0
        %497 = vmatprep.subr.mxu0 0.0
        %498 = vmatpush2.msra.mxu0 0.0
        %499 = vmatprep.subr.mxu0 0.0
        %500 = vmatpush2.msra.mxu0 0.0
        %501 = vmatprep.subr.mxu0 0.0
        %502 = vmatpush2.msra.mxu0 0.0
        %503 = vmatprep.subr.mxu0 0.0
        %504 = vmatpush2.msra.mxu0 0.0
        %505 = vmatprep.subr.mxu0 0.0
        %506 = vmatpush2.msra.mxu0 0.0
        %507 = vmatprep.subr.mxu0 0.0
        %508 = vmatpush2.msra.mxu0 0.0
        %509 = vmatprep.subr.mxu0 0.0
        %510 = vmatpush2.msra.mxu0 0.0
        %511 = vmatprep.subr.mxu0 0.0
        %512 = vmatpush2.msra.mxu0 0.0
        %513 = vmatprep.subr.mxu0 0.0
        %514 = vmatpush2.msra.mxu0 0.0
        %515 = vmatprep.subr.mxu0 0.0
        %516 = vmatpush2.msra.mxu0 0.0
        %517 = vmatprep.subr.mxu0 0.0
        %518 = vmatpush2.msra.mxu0 0.0
        %519 = vmatprep.subr.mxu0 0.0
        %520 = vmatpush2.msra.mxu0 0.0
        %521 = vmatprep.subr.mxu0 0.0
        %522 = vmatpush2.msra.mxu0 0.0
        %523 = vmatprep.subr.mxu0 0.0
        %524 = vmatpush2.msra.mxu0 0.0
        %525 = vmatprep.subr.mxu0 0.0
        %526 = vmatpush2.msra.mxu0 0.0
        %527 = vmatprep.mubr.f32.mxu0 0.0
        %528 = vmatmul.mubr.f32.gmra.mxu0 %v461
        %v529 = vpop.f32.mrf.mxu0
        %v530 = vadd.f32 %v457, %v529
        %v531 = vpop.f32.mrf.mxu0
        %532 = vdwg.mxu0
        %v533 = vmax.f32 %v530, 0.0
        %v534 = vld [vmem:[%s384] sm:$0xff]
        %v535 = vld [vmem:[#allocation7] sm:$0xff]
        %v536 = vld [vmem:[#allocation7 + $0x8] sm:$0xff]
        %v537 = vld [vmem:[#allocation7 + $0x10] sm:$0xff]
        %v538 = vld [vmem:[#allocation7 + $0x18] sm:$0xff]
        %v539 = vld [vmem:[#allocation7 + $0x20] sm:$0xff]
        %v540 = vld [vmem:[#allocation7 + $0x28] sm:$0xff]
        %v541 = vld [vmem:[#allocation7 + $0x30] sm:$0xff]
        %v542 = vld [vmem:[#allocation7 + $0x38] sm:$0xff]
        %v543 = vld [vmem:[#allocation7 + $0x40] sm:$0xff]
        %v544 = vld [vmem:[#allocation7 + $0x48] sm:$0xff]
        %v545 = vld [vmem:[#allocation7 + $0x50] sm:$0xff]
        %v546 = vld [vmem:[#allocation7 + $0x58] sm:$0xff]
        %v547 = vld [vmem:[#allocation7 + $0x60] sm:$0xff]
        %v548 = vld [vmem:[#allocation7 + $0x68] sm:$0xff]
        %v549 = vld [vmem:[#allocation7 + $0x70] sm:$0xff]
        %v550 = vld [vmem:[#allocation7 + $0x78] sm:$0xff]
        %v551 = vld [vmem:[#allocation7 + $0x80] sm:$0xff]
        %v552 = vld [vmem:[#allocation7 + $0x88] sm:$0xff]
        %v553 = vld [vmem:[#allocation7 + $0x90] sm:$0xff]
        %v554 = vld [vmem:[#allocation7 + $0x98] sm:$0xff]
        %v555 = vld [vmem:[#allocation7 + $0xa0] sm:$0xff]
        %v556 = vld [vmem:[#allocation7 + $0xa8] sm:$0xff]
        %v557 = vld [vmem:[#allocation7 + $0xb0] sm:$0xff]
        %v558 = vld [vmem:[#allocation7 + $0xb8] sm:$0xff]
        %v559 = vld [vmem:[#allocation7 + $0xc0] sm:$0xff]
        %v560 = vld [vmem:[#allocation7 + $0xc8] sm:$0xff]
        %v561 = vld [vmem:[#allocation7 + $0xd0] sm:$0xff]
        %v562 = vld [vmem:[#allocation7 + $0xd8] sm:$0xff]
        %v563 = vld [vmem:[#allocation7 + $0xe0] sm:$0xff]
        %v564 = vld [vmem:[#allocation7 + $0xe8] sm:$0xff]
        %v565 = vld [vmem:[#allocation7 + $0xf0] sm:$0xff]
        %v566 = vld [vmem:[#allocation7 + $0xf8] sm:$0xff]
        %v567 = vld [vmem:[#allocation7 + $0x100] sm:$0xff]
        %v568 = vld [vmem:[#allocation7 + $0x108] sm:$0xff]
        %v569 = vld [vmem:[#allocation7 + $0x110] sm:$0xff]
        %v570 = vld [vmem:[#allocation7 + $0x118] sm:$0xff]
        %v571 = vld [vmem:[#allocation7 + $0x120] sm:$0xff]
        %v572 = vld [vmem:[#allocation7 + $0x128] sm:$0xff]
        %v573 = vld [vmem:[#allocation7 + $0x130] sm:$0xff]
        %v574 = vld [vmem:[#allocation7 + $0x138] sm:$0xff]
        %v575 = vld [vmem:[#allocation7 + $0x140] sm:$0xff]
        %v576 = vld [vmem:[#allocation7 + $0x148] sm:$0xff]
        %v577 = vld [vmem:[#allocation7 + $0x150] sm:$0xff]
        %v578 = vld [vmem:[#allocation7 + $0x158] sm:$0xff]
        %v579 = vld [vmem:[#allocation7 + $0x160] sm:$0xff]
        %v580 = vld [vmem:[#allocation7 + $0x168] sm:$0xff]
        %v581 = vld [vmem:[#allocation7 + $0x170] sm:$0xff]
        %v582 = vld [vmem:[#allocation7 + $0x178] sm:$0xff]
        %v583 = vld [vmem:[#allocation7 + $0x180] sm:$0xff]
        %v584 = vld [vmem:[#allocation7 + $0x188] sm:$0xff]
        %v585 = vld [vmem:[#allocation7 + $0x190] sm:$0xff]
        %v586 = vld [vmem:[#allocation7 + $0x198] sm:$0xff]
        %v587 = vld [vmem:[#allocation7 + $0x1a0] sm:$0xff]
        %v588 = vld [vmem:[#allocation7 + $0x1a8] sm:$0xff]
        %v589 = vld [vmem:[#allocation7 + $0x1b0] sm:$0xff]
        %v590 = vld [vmem:[#allocation7 + $0x1b8] sm:$0xff]
        %v591 = vld [vmem:[#allocation7 + $0x1c0] sm:$0xff]
        %v592 = vld [vmem:[#allocation7 + $0x1c8] sm:$0xff]
        %v593 = vld [vmem:[#allocation7 + $0x1d0] sm:$0xff]
        %v594 = vld [vmem:[#allocation7 + $0x1d8] sm:$0xff]
        %v595 = vld [vmem:[#allocation7 + $0x1e0] sm:$0xff]
        %v596 = vld [vmem:[#allocation7 + $0x1e8] sm:$0xff]
        %v597 = vld [vmem:[#allocation7 + $0x1f0] sm:$0xff]
        %v598 = vld [vmem:[#allocation7 + $0x1f8] sm:$0xff]
        %vm599 = vcmask 523264
        %v601 = vsel %vm599, %v534, 0
        %603 = vmatprep.subr.mxu0 0.0
        %604 = vmatpush1.msra.mxu0 0.0
        %605 = vmatprep.subr.mxu0 0.0
        %606 = vmatpush1.msra.mxu0 0.0
        %607 = vmatprep.subr.mxu0 0.0
        %608 = vmatpush1.msra.mxu0 0.0
        %609 = vmatprep.subr.mxu0 0.0
        %610 = vmatpush1.msra.mxu0 0.0
        %611 = vmatprep.subr.mxu0 0.0
        %612 = vmatpush1.msra.mxu0 0.0
        %613 = vmatprep.subr.mxu0 0.0
        %614 = vmatpush1.msra.mxu0 0.0
        %615 = vmatprep.subr.mxu0 0.0
        %616 = vmatpush1.msra.mxu0 0.0
        %617 = vmatprep.subr.mxu0 0.0
        %618 = vmatpush1.msra.mxu0 0.0
        %619 = vmatprep.subr.mxu0 %v592
        %620 = vmatpush1.msra.mxu0 %v591
        %621 = vmatprep.subr.mxu0 %v584
        %622 = vmatpush1.msra.mxu0 %v583
        %623 = vmatprep.subr.mxu0 %v576
        %624 = vmatpush1.msra.mxu0 %v575
        %625 = vmatprep.subr.mxu0 %v568
        %626 = vmatpush1.msra.mxu0 %v567
        %627 = vmatprep.subr.mxu0 %v560
        %628 = vmatpush1.msra.mxu0 %v559
        %629 = vmatprep.subr.mxu0 %v552
        %630 = vmatpush1.msra.mxu0 %v551
        %631 = vmatprep.subr.mxu0 %v544
        %632 = vmatpush1.msra.mxu0 %v543
        %633 = vmatprep.subr.mxu0 %v536
        %634 = vmatpush1.msra.mxu0 %v535
        %635 = vmatprep.subr.mxu0 0.0
        %636 = vmatpush2.msra.mxu0 0.0
        %637 = vmatprep.subr.mxu0 0.0
        %638 = vmatpush2.msra.mxu0 0.0
        %639 = vmatprep.subr.mxu0 0.0
        %640 = vmatpush2.msra.mxu0 0.0
        %641 = vmatprep.subr.mxu0 0.0
        %642 = vmatpush2.msra.mxu0 0.0
        %643 = vmatprep.subr.mxu0 0.0
        %644 = vmatpush2.msra.mxu0 0.0
        %645 = vmatprep.subr.mxu0 0.0
        %646 = vmatpush2.msra.mxu0 0.0
        %647 = vmatprep.subr.mxu0 0.0
        %648 = vmatpush2.msra.mxu0 0.0
        %649 = vmatprep.subr.mxu0 0.0
        %650 = vmatpush2.msra.mxu0 0.0
        %651 = vmatprep.subr.mxu0 0.0
        %652 = vmatpush2.msra.mxu0 0.0
        %653 = vmatprep.subr.mxu0 0.0
        %654 = vmatpush2.msra.mxu0 0.0
        %655 = vmatprep.subr.mxu0 0.0
        %656 = vmatpush2.msra.mxu0 0.0
        %657 = vmatprep.subr.mxu0 0.0
        %658 = vmatpush2.msra.mxu0 0.0
        %659 = vmatprep.subr.mxu0 0.0
        %660 = vmatpush2.msra.mxu0 0.0
        %661 = vmatprep.subr.mxu0 0.0
        %662 = vmatpush2.msra.mxu0 0.0
        %663 = vmatprep.subr.mxu0 0.0
        %664 = vmatpush2.msra.mxu0 0.0
        %665 = vmatprep.subr.mxu0 0.0
        %666 = vmatpush2.msra.mxu0 0.0
        %667 = vmatprep.mubr.f32.mxu0 0.0
        %668 = vmatmul.mubr.f32.gmra.mxu0 %v601
        %v669 = vpop.f32.mrf.mxu0
        %v670 = vadd.f32 0.0, %v669
        %v671 = vpop.f32.mrf.mxu0
        %v672 = vadd.f32 0.0, %v671
        %673 = vdwg.mxu0
        %674 = vmatprep.subr.mxu0 0.0
        %675 = vmatpush1.msra.mxu0 0.0
        %676 = vmatprep.subr.mxu0 0.0
        %677 = vmatpush1.msra.mxu0 0.0
        %678 = vmatprep.subr.mxu0 0.0
        %679 = vmatpush1.msra.mxu0 0.0
        %680 = vmatprep.subr.mxu0 0.0
        %681 = vmatpush1.msra.mxu0 0.0
        %682 = vmatprep.subr.mxu0 0.0
        %683 = vmatpush1.msra.mxu0 0.0
        %684 = vmatprep.subr.mxu0 0.0
        %685 = vmatpush1.msra.mxu0 0.0
        %686 = vmatprep.subr.mxu0 0.0
        %687 = vmatpush1.msra.mxu0 0.0
        %688 = vmatprep.subr.mxu0 0.0
        %689 = vmatpush1.msra.mxu0 0.0
        %690 = vmatprep.subr.mxu0 %v594
        %691 = vmatpush1.msra.mxu0 %v593
        %692 = vmatprep.subr.mxu0 %v586
        %693 = vmatpush1.msra.mxu0 %v585
        %694 = vmatprep.subr.mxu0 %v578
        %695 = vmatpush1.msra.mxu0 %v577
        %696 = vmatprep.subr.mxu0 %v570
        %697 = vmatpush1.msra.mxu0 %v569
        %698 = vmatprep.subr.mxu0 %v562
        %699 = vmatpush1.msra.mxu0 %v561
        %700 = vmatprep.subr.mxu0 %v554
        %701 = vmatpush1.msra.mxu0 %v553
        %702 = vmatprep.subr.mxu0 %v546
        %703 = vmatpush1.msra.mxu0 %v545
        %704 = vmatprep.subr.mxu0 %v538
        %705 = vmatpush1.msra.mxu0 %v537
        %706 = vmatprep.subr.mxu0 0.0
        %707 = vmatpush2.msra.mxu0 0.0
        %708 = vmatprep.subr.mxu0 0.0
        %709 = vmatpush2.msra.mxu0 0.0
        %710 = vmatprep.subr.mxu0 0.0
        %711 = vmatpush2.msra.mxu0 0.0
        %712 = vmatprep.subr.mxu0 0.0
        %713 = vmatpush2.msra.mxu0 0.0
        %714 = vmatprep.subr.mxu0 0.0
        %715 = vmatpush2.msra.mxu0 0.0
        %716 = vmatprep.subr.mxu0 0.0
        %717 = vmatpush2.msra.mxu0 0.0
        %718 = vmatprep.subr.mxu0 0.0
        %719 = vmatpush2.msra.mxu0 0.0
        %720 = vmatprep.subr.mxu0 0.0
        %721 = vmatpush2.msra.mxu0 0.0
        %722 = vmatprep.subr.mxu0 0.0
        %723 = vmatpush2.msra.mxu0 0.0
        %724 = vmatprep.subr.mxu0 0.0
        %725 = vmatpush2.msra.mxu0 0.0
        %726 = vmatprep.subr.mxu0 0.0
        %727 = vmatpush2.msra.mxu0 0.0
        %728 = vmatprep.subr.mxu0 0.0
        %729 = vmatpush2.msra.mxu0 0.0
        %730 = vmatprep.subr.mxu0 0.0
        %731 = vmatpush2.msra.mxu0 0.0
        %732 = vmatprep.subr.mxu0 0.0
        %733 = vmatpush2.msra.mxu0 0.0
        %734 = vmatprep.subr.mxu0 0.0
        %735 = vmatpush2.msra.mxu0 0.0
        %736 = vmatprep.subr.mxu0 0.0
        %737 = vmatpush2.msra.mxu0 0.0
        %738 = vmatprep.mubr.f32.mxu0 0.0
        %739 = vmatmul.mubr.f32.gmra.mxu0 %v601
        %v740 = vpop.f32.mrf.mxu0
        %v741 = vadd.f32 0.0, %v740
        %v742 = vpop.f32.mrf.mxu0
        %v743 = vadd.f32 0.0, %v742
        %744 = vdwg.mxu0
        %745 = vmatprep.subr.mxu0 0.0
        %746 = vmatpush1.msra.mxu0 0.0
        %747 = vmatprep.subr.mxu0 0.0
        %748 = vmatpush1.msra.mxu0 0.0
        %749 = vmatprep.subr.mxu0 0.0
        %750 = vmatpush1.msra.mxu0 0.0
        %751 = vmatprep.subr.mxu0 0.0
        %752 = vmatpush1.msra.mxu0 0.0
        %753 = vmatprep.subr.mxu0 0.0
        %754 = vmatpush1.msra.mxu0 0.0
        %755 = vmatprep.subr.mxu0 0.0
        %756 = vmatpush1.msra.mxu0 0.0
        %757 = vmatprep.subr.mxu0 0.0
        %758 = vmatpush1.msra.mxu0 0.0
        %759 = vmatprep.subr.mxu0 0.0
        %760 = vmatpush1.msra.mxu0 0.0
        %761 = vmatprep.subr.mxu0 %v596
        %762 = vmatpush1.msra.mxu0 %v595
        %763 = vmatprep.subr.mxu0 %v588
        %764 = vmatpush1.msra.mxu0 %v587
        %765 = vmatprep.subr.mxu0 %v580
        %766 = vmatpush1.msra.mxu0 %v579
        %767 = vmatprep.subr.mxu0 %v572
        %768 = vmatpush1.msra.mxu0 %v571
        %769 = vmatprep.subr.mxu0 %v564
        %770 = vmatpush1.msra.mxu0 %v563
        %771 = vmatprep.subr.mxu0 %v556
        %772 = vmatpush1.msra.mxu0 %v555
        %773 = vmatprep.subr.mxu0 %v548
        %774 = vmatpush1.msra.mxu0 %v547
        %775 = vmatprep.subr.mxu0 %v540
        %776 = vmatpush1.msra.mxu0 %v539
        %777 = vmatprep.subr.mxu0 0.0
        %778 = vmatpush2.msra.mxu0 0.0
        %779 = vmatprep.subr.mxu0 0.0
        %780 = vmatpush2.msra.mxu0 0.0
        %781 = vmatprep.subr.mxu0 0.0
        %782 = vmatpush2.msra.mxu0 0.0
        %783 = vmatprep.subr.mxu0 0.0
        %784 = vmatpush2.msra.mxu0 0.0
        %785 = vmatprep.subr.mxu0 0.0
        %786 = vmatpush2.msra.mxu0 0.0
        %787 = vmatprep.subr.mxu0 0.0
        %788 = vmatpush2.msra.mxu0 0.0
        %789 = vmatprep.subr.mxu0 0.0
        %790 = vmatpush2.msra.mxu0 0.0
        %791 = vmatprep.subr.mxu0 0.0
        %792 = vmatpush2.msra.mxu0 0.0
        %793 = vmatprep.subr.mxu0 0.0
        %794 = vmatpush2.msra.mxu0 0.0
        %795 = vmatprep.subr.mxu0 0.0
        %796 = vmatpush2.msra.mxu0 0.0
        %797 = vmatprep.subr.mxu0 0.0
        %798 = vmatpush2.msra.mxu0 0.0
        %799 = vmatprep.subr.mxu0 0.0
        %800 = vmatpush2.msra.mxu0 0.0
        %801 = vmatprep.subr.mxu0 0.0
        %802 = vmatpush2.msra.mxu0 0.0
        %803 = vmatprep.subr.mxu0 0.0
        %804 = vmatpush2.msra.mxu0 0.0
        %805 = vmatprep.subr.mxu0 0.0
        %806 = vmatpush2.msra.mxu0 0.0
        %807 = vmatprep.subr.mxu0 0.0
        %808 = vmatpush2.msra.mxu0 0.0
        %809 = vmatprep.mubr.f32.mxu0 0.0
        %810 = vmatmul.mubr.f32.gmra.mxu0 %v601
        %v811 = vpop.f32.mrf.mxu0
        %v812 = vadd.f32 0.0, %v811
        %v813 = vpop.f32.mrf.mxu0
        %v814 = vadd.f32 0.0, %v813
        %815 = vdwg.mxu0
        %816 = vmatprep.subr.mxu0 0.0
        %817 = vmatpush1.msra.mxu0 0.0
        %818 = vmatprep.subr.mxu0 0.0
        %819 = vmatpush1.msra.mxu0 0.0
        %820 = vmatprep.subr.mxu0 0.0
        %821 = vmatpush1.msra.mxu0 0.0
        %822 = vmatprep.subr.mxu0 0.0
        %823 = vmatpush1.msra.mxu0 0.0
        %824 = vmatprep.subr.mxu0 0.0
        %825 = vmatpush1.msra.mxu0 0.0
        %826 = vmatprep.subr.mxu0 0.0
        %827 = vmatpush1.msra.mxu0 0.0
        %828 = vmatprep.subr.mxu0 0.0
        %829 = vmatpush1.msra.mxu0 0.0
        %830 = vmatprep.subr.mxu0 0.0
        %831 = vmatpush1.msra.mxu0 0.0
        %832 = vmatprep.subr.mxu0 %v598
        %833 = vmatpush1.msra.mxu0 %v597
        %834 = vmatprep.subr.mxu0 %v590
        %835 = vmatpush1.msra.mxu0 %v589
        %836 = vmatprep.subr.mxu0 %v582
        %837 = vmatpush1.msra.mxu0 %v581
        %838 = vmatprep.subr.mxu0 %v574
        %839 = vmatpush1.msra.mxu0 %v573
        %840 = vmatprep.subr.mxu0 %v566
        %841 = vmatpush1.msra.mxu0 %v565
        %842 = vmatprep.subr.mxu0 %v558
        %843 = vmatpush1.msra.mxu0 %v557
        %844 = vmatprep.subr.mxu0 %v550
        %845 = vmatpush1.msra.mxu0 %v549
        %846 = vmatprep.subr.mxu0 %v542
        %847 = vmatpush1.msra.mxu0 %v541
        %848 = vmatprep.subr.mxu0 0.0
        %849 = vmatpush2.msra.mxu0 0.0
        %850 = vmatprep.subr.mxu0 0.0
        %851 = vmatpush2.msra.mxu0 0.0
        %852 = vmatprep.subr.mxu0 0.0
        %853 = vmatpush2.msra.mxu0 0.0
        %854 = vmatprep.subr.mxu0 0.0
        %855 = vmatpush2.msra.mxu0 0.0
        %856 = vmatprep.subr.mxu0 0.0
        %857 = vmatpush2.msra.mxu0 0.0
        %858 = vmatprep.subr.mxu0 0.0
        %859 = vmatpush2.msra.mxu0 0.0
        %860 = vmatprep.subr.mxu0 0.0
        %861 = vmatpush2.msra.mxu0 0.0
        %862 = vmatprep.subr.mxu0 0.0
        %863 = vmatpush2.msra.mxu0 0.0
        %864 = vmatprep.subr.mxu0 0.0
        %865 = vmatpush2.msra.mxu0 0.0
        %866 = vmatprep.subr.mxu0 0.0
        %867 = vmatpush2.msra.mxu0 0.0
        %868 = vmatprep.subr.mxu0 0.0
        %869 = vmatpush2.msra.mxu0 0.0
        %870 = vmatprep.subr.mxu0 0.0
        %871 = vmatpush2.msra.mxu0 0.0
        %872 = vmatprep.subr.mxu0 0.0
        %873 = vmatpush2.msra.mxu0 0.0
        %874 = vmatprep.subr.mxu0 0.0
        %875 = vmatpush2.msra.mxu0 0.0
        %876 = vmatprep.subr.mxu0 0.0
        %877 = vmatpush2.msra.mxu0 0.0
        %878 = vmatprep.subr.mxu0 0.0
        %879 = vmatpush2.msra.mxu0 0.0
        %880 = vmatprep.mubr.f32.mxu0 0.0
        %881 = vmatmul.mubr.f32.gmra.mxu0 %v601
        %v882 = vpop.f32.mrf.mxu0
        %v883 = vadd.f32 0.0, %v882
        %v884 = vpop.f32.mrf.mxu0
        %v885 = vadd.f32 0.0, %v884
        %886 = vdwg.mxu0
        %v887 = vld [vmem:[#allocation9] sm:$0xff]
        %v888 = vld [vmem:[#allocation9 + $0x8] sm:$0xff]
        %v889 = vld [vmem:[#allocation9 + $0x10] sm:$0xff]
        %v890 = vld [vmem:[#allocation9 + $0x18] sm:$0xff]
        %v891 = vld [vmem:[#allocation9 + $0x20] sm:$0xff]
        %v892 = vld [vmem:[#allocation9 + $0x28] sm:$0xff]
        %v893 = vld [vmem:[#allocation9 + $0x30] sm:$0xff]
        %v894 = vld [vmem:[#allocation9 + $0x38] sm:$0xff]
        %v895 = vld [vmem:[#allocation9 + $0x40] sm:$0xff]
        %v896 = vld [vmem:[#allocation9 + $0x48] sm:$0xff]
        %v897 = vld [vmem:[#allocation9 + $0x50] sm:$0xff]
        %v898 = vld [vmem:[#allocation9 + $0x58] sm:$0xff]
        %v899 = vld [vmem:[#allocation9 + $0x60] sm:$0xff]
        %v900 = vld [vmem:[#allocation9 + $0x68] sm:$0xff]
        %v901 = vld [vmem:[#allocation9 + $0x70] sm:$0xff]
        %v902 = vld [vmem:[#allocation9 + $0x78] sm:$0xff]
        %v903 = vld [vmem:[#allocation9 + $0x80] sm:$0xff]
        %v904 = vld [vmem:[#allocation9 + $0x88] sm:$0xff]
        %v905 = vld [vmem:[#allocation9 + $0x90] sm:$0xff]
        %v906 = vld [vmem:[#allocation9 + $0x98] sm:$0xff]
        %v907 = vld [vmem:[#allocation9 + $0xa0] sm:$0xff]
        %v908 = vld [vmem:[#allocation9 + $0xa8] sm:$0xff]
        %v909 = vld [vmem:[#allocation9 + $0xb0] sm:$0xff]
        %v910 = vld [vmem:[#allocation9 + $0xb8] sm:$0xff]
        %v911 = vld [vmem:[#allocation9 + $0xc0] sm:$0xff]
        %v912 = vld [vmem:[#allocation9 + $0xc8] sm:$0xff]
        %v913 = vld [vmem:[#allocation9 + $0xd0] sm:$0xff]
        %v914 = vld [vmem:[#allocation9 + $0xd8] sm:$0xff]
        %v915 = vld [vmem:[#allocation9 + $0xe0] sm:$0xff]
        %v916 = vld [vmem:[#allocation9 + $0xe8] sm:$0xff]
        %v917 = vld [vmem:[#allocation9 + $0xf0] sm:$0xff]
        %v918 = vld [vmem:[#allocation9 + $0xf8] sm:$0xff]
        %v919 = vld [vmem:[#allocation9 + $0x100] sm:$0xff]
        %v920 = vld [vmem:[#allocation9 + $0x108] sm:$0xff]
        %v921 = vld [vmem:[#allocation9 + $0x110] sm:$0xff]
        %v922 = vld [vmem:[#allocation9 + $0x118] sm:$0xff]
        %v923 = vld [vmem:[#allocation9 + $0x120] sm:$0xff]
        %v924 = vld [vmem:[#allocation9 + $0x128] sm:$0xff]
        %v925 = vld [vmem:[#allocation9 + $0x130] sm:$0xff]
        %v926 = vld [vmem:[#allocation9 + $0x138] sm:$0xff]
        %v927 = vld [vmem:[#allocation9 + $0x140] sm:$0xff]
        %v928 = vld [vmem:[#allocation9 + $0x148] sm:$0xff]
        %v929 = vld [vmem:[#allocation9 + $0x150] sm:$0xff]
        %v930 = vld [vmem:[#allocation9 + $0x158] sm:$0xff]
        %v931 = vld [vmem:[#allocation9 + $0x160] sm:$0xff]
        %v932 = vld [vmem:[#allocation9 + $0x168] sm:$0xff]
        %v933 = vld [vmem:[#allocation9 + $0x170] sm:$0xff]
        %v934 = vld [vmem:[#allocation9 + $0x178] sm:$0xff]
        %v935 = vld [vmem:[#allocation9 + $0x180] sm:$0xff]
        %v936 = vld [vmem:[#allocation9 + $0x188] sm:$0xff]
        %v937 = vld [vmem:[#allocation9 + $0x190] sm:$0xff]
        %v938 = vld [vmem:[#allocation9 + $0x198] sm:$0xff]
        %v939 = vld [vmem:[#allocation9 + $0x1a0] sm:$0xff]
        %v940 = vld [vmem:[#allocation9 + $0x1a8] sm:$0xff]
        %v941 = vld [vmem:[#allocation9 + $0x1b0] sm:$0xff]
        %v942 = vld [vmem:[#allocation9 + $0x1b8] sm:$0xff]
        %v943 = vld [vmem:[#allocation9 + $0x1c0] sm:$0xff]
        %v944 = vld [vmem:[#allocation9 + $0x1c8] sm:$0xff]
        %v945 = vld [vmem:[#allocation9 + $0x1d0] sm:$0xff]
        %v946 = vld [vmem:[#allocation9 + $0x1d8] sm:$0xff]
        %v947 = vld [vmem:[#allocation9 + $0x1e0] sm:$0xff]
        %v948 = vld [vmem:[#allocation9 + $0x1e8] sm:$0xff]
        %v949 = vld [vmem:[#allocation9 + $0x1f0] sm:$0xff]
        %v950 = vld [vmem:[#allocation9 + $0x1f8] sm:$0xff]
        %v951 = vld [vmem:[#allocation9 + $0x200] sm:$0xff]
        %v952 = vld [vmem:[#allocation9 + $0x208] sm:$0xff]
        %v953 = vld [vmem:[#allocation9 + $0x210] sm:$0xff]
        %v954 = vld [vmem:[#allocation9 + $0x218] sm:$0xff]
        %v955 = vld [vmem:[#allocation9 + $0x220] sm:$0xff]
        %v956 = vld [vmem:[#allocation9 + $0x228] sm:$0xff]
        %v957 = vld [vmem:[#allocation9 + $0x230] sm:$0xff]
        %v958 = vld [vmem:[#allocation9 + $0x238] sm:$0xff]
        %v959 = vld [vmem:[#allocation9 + $0x240] sm:$0xff]
        %v960 = vld [vmem:[#allocation9 + $0x248] sm:$0xff]
        %v961 = vld [vmem:[#allocation9 + $0x250] sm:$0xff]
        %v962 = vld [vmem:[#allocation9 + $0x258] sm:$0xff]
        %v963 = vld [vmem:[#allocation9 + $0x260] sm:$0xff]
        %v964 = vld [vmem:[#allocation9 + $0x268] sm:$0xff]
        %v965 = vld [vmem:[#allocation9 + $0x270] sm:$0xff]
        %v966 = vld [vmem:[#allocation9 + $0x278] sm:$0xff]
        %v967 = vld [vmem:[#allocation9 + $0x280] sm:$0xff]
        %v968 = vld [vmem:[#allocation9 + $0x288] sm:$0xff]
        %v969 = vld [vmem:[#allocation9 + $0x290] sm:$0xff]
        %v970 = vld [vmem:[#allocation9 + $0x298] sm:$0xff]
        %v971 = vld [vmem:[#allocation9 + $0x2a0] sm:$0xff]
        %v972 = vld [vmem:[#allocation9 + $0x2a8] sm:$0xff]
        %v973 = vld [vmem:[#allocation9 + $0x2b0] sm:$0xff]
        %v974 = vld [vmem:[#allocation9 + $0x2b8] sm:$0xff]
        %v975 = vld [vmem:[#allocation9 + $0x2c0] sm:$0xff]
        %v976 = vld [vmem:[#allocation9 + $0x2c8] sm:$0xff]
        %v977 = vld [vmem:[#allocation9 + $0x2d0] sm:$0xff]
        %v978 = vld [vmem:[#allocation9 + $0x2d8] sm:$0xff]
        %v979 = vld [vmem:[#allocation9 + $0x2e0] sm:$0xff]
        %v980 = vld [vmem:[#allocation9 + $0x2e8] sm:$0xff]
        %v981 = vld [vmem:[#allocation9 + $0x2f0] sm:$0xff]
        %v982 = vld [vmem:[#allocation9 + $0x2f8] sm:$0xff]
        %v983 = vld [vmem:[#allocation9 + $0x300] sm:$0xff]
        %v984 = vld [vmem:[#allocation9 + $0x308] sm:$0xff]
        %v985 = vld [vmem:[#allocation9 + $0x310] sm:$0xff]
        %v986 = vld [vmem:[#allocation9 + $0x318] sm:$0xff]
        %v987 = vld [vmem:[#allocation9 + $0x320] sm:$0xff]
        %v988 = vld [vmem:[#allocation9 + $0x328] sm:$0xff]
        %v989 = vld [vmem:[#allocation9 + $0x330] sm:$0xff]
        %v990 = vld [vmem:[#allocation9 + $0x338] sm:$0xff]
        %v991 = vld [vmem:[#allocation9 + $0x340] sm:$0xff]
        %v992 = vld [vmem:[#allocation9 + $0x348] sm:$0xff]
        %v993 = vld [vmem:[#allocation9 + $0x350] sm:$0xff]
        %v994 = vld [vmem:[#allocation9 + $0x358] sm:$0xff]
        %v995 = vld [vmem:[#allocation9 + $0x360] sm:$0xff]
        %v996 = vld [vmem:[#allocation9 + $0x368] sm:$0xff]
        %v997 = vld [vmem:[#allocation9 + $0x370] sm:$0xff]
        %v998 = vld [vmem:[#allocation9 + $0x378] sm:$0xff]
        %v999 = vld [vmem:[#allocation9 + $0x380] sm:$0xff]
        %v1000 = vld [vmem:[#allocation9 + $0x388] sm:$0xff]
        %v1001 = vld [vmem:[#allocation9 + $0x390] sm:$0xff]
        %v1002 = vld [vmem:[#allocation9 + $0x398] sm:$0xff]
        %v1003 = vld [vmem:[#allocation9 + $0x3a0] sm:$0xff]
        %v1004 = vld [vmem:[#allocation9 + $0x3a8] sm:$0xff]
        %v1005 = vld [vmem:[#allocation9 + $0x3b0] sm:$0xff]
        %v1006 = vld [vmem:[#allocation9 + $0x3b8] sm:$0xff]
        %v1007 = vld [vmem:[#allocation9 + $0x3c0] sm:$0xff]
        %v1008 = vld [vmem:[#allocation9 + $0x3c8] sm:$0xff]
        %v1009 = vld [vmem:[#allocation9 + $0x3d0] sm:$0xff]
        %v1010 = vld [vmem:[#allocation9 + $0x3d8] sm:$0xff]
        %v1011 = vld [vmem:[#allocation9 + $0x3e0] sm:$0xff]
        %v1012 = vld [vmem:[#allocation9 + $0x3e8] sm:$0xff]
        %v1013 = vld [vmem:[#allocation9 + $0x3f0] sm:$0xff]
        %v1014 = vld [vmem:[#allocation9 + $0x3f8] sm:$0xff]
        %1015 = vmatprep.subr.mxu0 %v1008
        %1016 = vmatpush1.msra.mxu0 %v1007
        %1017 = vmatprep.subr.mxu0 %v1000
        %1018 = vmatpush1.msra.mxu0 %v999
        %1019 = vmatprep.subr.mxu0 %v992
        %1020 = vmatpush1.msra.mxu0 %v991
        %1021 = vmatprep.subr.mxu0 %v984
        %1022 = vmatpush1.msra.mxu0 %v983
        %1023 = vmatprep.subr.mxu0 %v976
        %1024 = vmatpush1.msra.mxu0 %v975
        %1025 = vmatprep.subr.mxu0 %v968
        %1026 = vmatpush1.msra.mxu0 %v967
        %1027 = vmatprep.subr.mxu0 %v960
        %1028 = vmatpush1.msra.mxu0 %v959
        %1029 = vmatprep.subr.mxu0 %v952
        %1030 = vmatpush1.msra.mxu0 %v951
        %1031 = vmatprep.subr.mxu0 %v944
        %1032 = vmatpush1.msra.mxu0 %v943
        %1033 = vmatprep.subr.mxu0 %v936
        %1034 = vmatpush1.msra.mxu0 %v935
        %1035 = vmatprep.subr.mxu0 %v928
        %1036 = vmatpush1.msra.mxu0 %v927
        %1037 = vmatprep.subr.mxu0 %v920
        %1038 = vmatpush1.msra.mxu0 %v919
        %1039 = vmatprep.subr.mxu0 %v912
        %1040 = vmatpush1.msra.mxu0 %v911
        %1041 = vmatprep.subr.mxu0 %v904
        %1042 = vmatpush1.msra.mxu0 %v903
        %1043 = vmatprep.subr.mxu0 %v896
        %1044 = vmatpush1.msra.mxu0 %v895
        %1045 = vmatprep.subr.mxu0 %v888
        %1046 = vmatpush1.msra.mxu0 %v887
        %1047 = vmatprep.subr.mxu0 0.0
        %1048 = vmatpush2.msra.mxu0 0.0
        %1049 = vmatprep.subr.mxu0 0.0
        %1050 = vmatpush2.msra.mxu0 0.0
        %1051 = vmatprep.subr.mxu0 0.0
        %1052 = vmatpush2.msra.mxu0 0.0
        %1053 = vmatprep.subr.mxu0 0.0
        %1054 = vmatpush2.msra.mxu0 0.0
        %1055 = vmatprep.subr.mxu0 0.0
        %1056 = vmatpush2.msra.mxu0 0.0
        %1057 = vmatprep.subr.mxu0 0.0
        %1058 = vmatpush2.msra.mxu0 0.0
        %1059 = vmatprep.subr.mxu0 0.0
        %1060 = vmatpush2.msra.mxu0 0.0
        %1061 = vmatprep.subr.mxu0 0.0
        %1062 = vmatpush2.msra.mxu0 0.0
        %1063 = vmatprep.subr.mxu0 0.0
        %1064 = vmatpush2.msra.mxu0 0.0
        %1065 = vmatprep.subr.mxu0 0.0
        %1066 = vmatpush2.msra.mxu0 0.0
        %1067 = vmatprep.subr.mxu0 0.0
        %1068 = vmatpush2.msra.mxu0 0.0
        %1069 = vmatprep.subr.mxu0 0.0
        %1070 = vmatpush2.msra.mxu0 0.0
        %1071 = vmatprep.subr.mxu0 0.0
        %1072 = vmatpush2.msra.mxu0 0.0
        %1073 = vmatprep.subr.mxu0 0.0
        %1074 = vmatpush2.msra.mxu0 0.0
        %1075 = vmatprep.subr.mxu0 0.0
        %1076 = vmatpush2.msra.mxu0 0.0
        %1077 = vmatprep.subr.mxu0 0.0
        %1078 = vmatpush2.msra.mxu0 0.0
        %1079 = vmatprep.mubr.f32.mxu0 0.0
        %1080 = vmatmul.mubr.f32.gmra.mxu0 %v533
        %v1081 = vpop.f32.mrf.mxu0
        %v1082 = vadd.f32 0.0, %v1081
        %v1083 = vpop.f32.mrf.mxu0
        %v1084 = vadd.f32 0.0, %v1083
        %1085 = vdwg.mxu0
        %1086 = vmatprep.subr.mxu0 %v1010
        %1087 = vmatpush1.msra.mxu0 %v1009
        %1088 = vmatprep.subr.mxu0 %v1002
        %1089 = vmatpush1.msra.mxu0 %v1001
        %1090 = vmatprep.subr.mxu0 %v994
        %1091 = vmatpush1.msra.mxu0 %v993
        %1092 = vmatprep.subr.mxu0 %v986
        %1093 = vmatpush1.msra.mxu0 %v985
        %1094 = vmatprep.subr.mxu0 %v978
        %1095 = vmatpush1.msra.mxu0 %v977
        %1096 = vmatprep.subr.mxu0 %v970
        %1097 = vmatpush1.msra.mxu0 %v969
        %1098 = vmatprep.subr.mxu0 %v962
        %1099 = vmatpush1.msra.mxu0 %v961
        %1100 = vmatprep.subr.mxu0 %v954
        %1101 = vmatpush1.msra.mxu0 %v953
        %1102 = vmatprep.subr.mxu0 %v946
        %1103 = vmatpush1.msra.mxu0 %v945
        %1104 = vmatprep.subr.mxu0 %v938
        %1105 = vmatpush1.msra.mxu0 %v937
        %1106 = vmatprep.subr.mxu0 %v930
        %1107 = vmatpush1.msra.mxu0 %v929
        %1108 = vmatprep.subr.mxu0 %v922
        %1109 = vmatpush1.msra.mxu0 %v921
        %1110 = vmatprep.subr.mxu0 %v914
        %1111 = vmatpush1.msra.mxu0 %v913
        %1112 = vmatprep.subr.mxu0 %v906
        %1113 = vmatpush1.msra.mxu0 %v905
        %1114 = vmatprep.subr.mxu0 %v898
        %1115 = vmatpush1.msra.mxu0 %v897
        %1116 = vmatprep.subr.mxu0 %v890
        %1117 = vmatpush1.msra.mxu0 %v889
        %1118 = vmatprep.subr.mxu0 0.0
        %1119 = vmatpush2.msra.mxu0 0.0
        %1120 = vmatprep.subr.mxu0 0.0
        %1121 = vmatpush2.msra.mxu0 0.0
        %1122 = vmatprep.subr.mxu0 0.0
        %1123 = vmatpush2.msra.mxu0 0.0
        %1124 = vmatprep.subr.mxu0 0.0
        %1125 = vmatpush2.msra.mxu0 0.0
        %1126 = vmatprep.subr.mxu0 0.0
        %1127 = vmatpush2.msra.mxu0 0.0
        %1128 = vmatprep.subr.mxu0 0.0
        %1129 = vmatpush2.msra.mxu0 0.0
        %1130 = vmatprep.subr.mxu0 0.0
        %1131 = vmatpush2.msra.mxu0 0.0
        %1132 = vmatprep.subr.mxu0 0.0
        %1133 = vmatpush2.msra.mxu0 0.0
        %1134 = vmatprep.subr.mxu0 0.0
        %1135 = vmatpush2.msra.mxu0 0.0
        %1136 = vmatprep.subr.mxu0 0.0
        %1137 = vmatpush2.msra.mxu0 0.0
        %1138 = vmatprep.subr.mxu0 0.0
        %1139 = vmatpush2.msra.mxu0 0.0
        %1140 = vmatprep.subr.mxu0 0.0
        %1141 = vmatpush2.msra.mxu0 0.0
        %1142 = vmatprep.subr.mxu0 0.0
        %1143 = vmatpush2.msra.mxu0 0.0
        %1144 = vmatprep.subr.mxu0 0.0
        %1145 = vmatpush2.msra.mxu0 0.0
        %1146 = vmatprep.subr.mxu0 0.0
        %1147 = vmatpush2.msra.mxu0 0.0
        %1148 = vmatprep.subr.mxu0 0.0
        %1149 = vmatpush2.msra.mxu0 0.0
        %1150 = vmatprep.mubr.f32.mxu0 0.0
        %1151 = vmatmul.mubr.f32.gmra.mxu0 %v533
        %v1152 = vpop.f32.mrf.mxu0
        %v1153 = vadd.f32 0.0, %v1152
        %v1154 = vpop.f32.mrf.mxu0
        %v1155 = vadd.f32 0.0, %v1154
        %1156 = vdwg.mxu0
        %1157 = vmatprep.subr.mxu0 %v1012
        %1158 = vmatpush1.msra.mxu0 %v1011
        %1159 = vmatprep.subr.mxu0 %v1004
        %1160 = vmatpush1.msra.mxu0 %v1003
        %1161 = vmatprep.subr.mxu0 %v996
        %1162 = vmatpush1.msra.mxu0 %v995
        %1163 = vmatprep.subr.mxu0 %v988
        %1164 = vmatpush1.msra.mxu0 %v987
        %1165 = vmatprep.subr.mxu0 %v980
        %1166 = vmatpush1.msra.mxu0 %v979
        %1167 = vmatprep.subr.mxu0 %v972
        %1168 = vmatpush1.msra.mxu0 %v971
        %1169 = vmatprep.subr.mxu0 %v964
        %1170 = vmatpush1.msra.mxu0 %v963
        %1171 = vmatprep.subr.mxu0 %v956
        %1172 = vmatpush1.msra.mxu0 %v955
        %1173 = vmatprep.subr.mxu0 %v948
        %1174 = vmatpush1.msra.mxu0 %v947
        %1175 = vmatprep.subr.mxu0 %v940
        %1176 = vmatpush1.msra.mxu0 %v939
        %1177 = vmatprep.subr.mxu0 %v932
        %1178 = vmatpush1.msra.mxu0 %v931
        %1179 = vmatprep.subr.mxu0 %v924
        %1180 = vmatpush1.msra.mxu0 %v923
        %1181 = vmatprep.subr.mxu0 %v916
        %1182 = vmatpush1.msra.mxu0 %v915
        %1183 = vmatprep.subr.mxu0 %v908
        %1184 = vmatpush1.msra.mxu0 %v907
        %1185 = vmatprep.subr.mxu0 %v900
        %1186 = vmatpush1.msra.mxu0 %v899
        %1187 = vmatprep.subr.mxu0 %v892
        %1188 = vmatpush1.msra.mxu0 %v891
        %1189 = vmatprep.subr.mxu0 0.0
        %1190 = vmatpush2.msra.mxu0 0.0
        %1191 = vmatprep.subr.mxu0 0.0
        %1192 = vmatpush2.msra.mxu0 0.0
        %1193 = vmatprep.subr.mxu0 0.0
        %1194 = vmatpush2.msra.mxu0 0.0
        %1195 = vmatprep.subr.mxu0 0.0
        %1196 = vmatpush2.msra.mxu0 0.0
        %1197 = vmatprep.subr.mxu0 0.0
        %1198 = vmatpush2.msra.mxu0 0.0
        %1199 = vmatprep.subr.mxu0 0.0
        %1200 = vmatpush2.msra.mxu0 0.0
        %1201 = vmatprep.subr.mxu0 0.0
        %1202 = vmatpush2.msra.mxu0 0.0
        %1203 = vmatprep.subr.mxu0 0.0
        %1204 = vmatpush2.msra.mxu0 0.0
        %1205 = vmatprep.subr.mxu0 0.0
        %1206 = vmatpush2.msra.mxu0 0.0
        %1207 = vmatprep.subr.mxu0 0.0
        %1208 = vmatpush2.msra.mxu0 0.0
        %1209 = vmatprep.subr.mxu0 0.0
        %1210 = vmatpush2.msra.mxu0 0.0
        %1211 = vmatprep.subr.mxu0 0.0
        %1212 = vmatpush2.msra.mxu0 0.0
        %1213 = vmatprep.subr.mxu0 0.0
        %1214 = vmatpush2.msra.mxu0 0.0
        %1215 = vmatprep.subr.mxu0 0.0
        %1216 = vmatpush2.msra.mxu0 0.0
        %1217 = vmatprep.subr.mxu0 0.0
        %1218 = vmatpush2.msra.mxu0 0.0
        %1219 = vmatprep.subr.mxu0 0.0
        %1220 = vmatpush2.msra.mxu0 0.0
        %1221 = vmatprep.mubr.f32.mxu0 0.0
        %1222 = vmatmul.mubr.f32.gmra.mxu0 %v533
        %v1223 = vpop.f32.mrf.mxu0
        %v1224 = vadd.f32 0.0, %v1223
        %v1225 = vpop.f32.mrf.mxu0
        %v1226 = vadd.f32 0.0, %v1225
        %1227 = vdwg.mxu0
        %1228 = vmatprep.subr.mxu0 %v1014
        %1229 = vmatpush1.msra.mxu0 %v1013
        %1230 = vmatprep.subr.mxu0 %v1006
        %1231 = vmatpush1.msra.mxu0 %v1005
        %1232 = vmatprep.subr.mxu0 %v998
        %1233 = vmatpush1.msra.mxu0 %v997
        %1234 = vmatprep.subr.mxu0 %v990
        %1235 = vmatpush1.msra.mxu0 %v989
        %1236 = vmatprep.subr.mxu0 %v982
        %1237 = vmatpush1.msra.mxu0 %v981
        %1238 = vmatprep.subr.mxu0 %v974
        %1239 = vmatpush1.msra.mxu0 %v973
        %1240 = vmatprep.subr.mxu0 %v966
        %1241 = vmatpush1.msra.mxu0 %v965
        %1242 = vmatprep.subr.mxu0 %v958
        %1243 = vmatpush1.msra.mxu0 %v957
        %1244 = vmatprep.subr.mxu0 %v950
        %1245 = vmatpush1.msra.mxu0 %v949
        %1246 = vmatprep.subr.mxu0 %v942
        %1247 = vmatpush1.msra.mxu0 %v941
        %1248 = vmatprep.subr.mxu0 %v934
        %1249 = vmatpush1.msra.mxu0 %v933
        %1250 = vmatprep.subr.mxu0 %v926
        %1251 = vmatpush1.msra.mxu0 %v925
        %1252 = vmatprep.subr.mxu0 %v918
        %1253 = vmatpush1.msra.mxu0 %v917
        %1254 = vmatprep.subr.mxu0 %v910
        %1255 = vmatpush1.msra.mxu0 %v909
        %1256 = vmatprep.subr.mxu0 %v902
        %1257 = vmatpush1.msra.mxu0 %v901
        %1258 = vmatprep.subr.mxu0 %v894
        %1259 = vmatpush1.msra.mxu0 %v893
        %1260 = vmatprep.subr.mxu0 0.0
        %1261 = vmatpush2.msra.mxu0 0.0
        %1262 = vmatprep.subr.mxu0 0.0
        %1263 = vmatpush2.msra.mxu0 0.0
        %1264 = vmatprep.subr.mxu0 0.0
        %1265 = vmatpush2.msra.mxu0 0.0
        %1266 = vmatprep.subr.mxu0 0.0
        %1267 = vmatpush2.msra.mxu0 0.0
        %1268 = vmatprep.subr.mxu0 0.0
        %1269 = vmatpush2.msra.mxu0 0.0
        %1270 = vmatprep.subr.mxu0 0.0
        %1271 = vmatpush2.msra.mxu0 0.0
        %1272 = vmatprep.subr.mxu0 0.0
        %1273 = vmatpush2.msra.mxu0 0.0
        %1274 = vmatprep.subr.mxu0 0.0
        %1275 = vmatpush2.msra.mxu0 0.0
        %1276 = vmatprep.subr.mxu0 0.0
        %1277 = vmatpush2.msra.mxu0 0.0
        %1278 = vmatprep.subr.mxu0 0.0
        %1279 = vmatpush2.msra.mxu0 0.0
        %1280 = vmatprep.subr.mxu0 0.0
        %1281 = vmatpush2.msra.mxu0 0.0
        %1282 = vmatprep.subr.mxu0 0.0
        %1283 = vmatpush2.msra.mxu0 0.0
        %1284 = vmatprep.subr.mxu0 0.0
        %1285 = vmatpush2.msra.mxu0 0.0
        %1286 = vmatprep.subr.mxu0 0.0
        %1287 = vmatpush2.msra.mxu0 0.0
        %1288 = vmatprep.subr.mxu0 0.0
        %1289 = vmatpush2.msra.mxu0 0.0
        %1290 = vmatprep.subr.mxu0 0.0
        %1291 = vmatpush2.msra.mxu0 0.0
        %1292 = vmatprep.mubr.f32.mxu0 0.0
        %1293 = vmatmul.mubr.f32.gmra.mxu0 %v533
        %v1294 = vpop.f32.mrf.mxu0
        %v1295 = vadd.f32 0.0, %v1294
        %v1296 = vpop.f32.mrf.mxu0
        %v1297 = vadd.f32 0.0, %v1296
        %1298 = vdwg.mxu0
        %v1299 = vmul.f32 %v670, %v1082
        %v1300 = vmul.f32 %v672, %v1084
        %v1301 = vmul.f32 %v741, %v1153
        %v1302 = vmul.f32 %v743, %v1155
        %v1303 = vmul.f32 %v812, %v1224
        %v1304 = vmul.f32 %v814, %v1226
        %v1305 = vmul.f32 %v883, %v1295
        %v1306 = vmul.f32 %v885, %v1297
        %v1307 = vadd.f32 %v1299, %v1300
        %v1308 = vadd.f32 %v1307, %v1301
        %v1309 = vadd.f32 %v1308, %v1302
        %v1310 = vadd.f32 %v1309, %v1303
        %v1311 = vadd.f32 %v1310, %v1304
        %v1312 = vadd.f32 %v1311, %v1305
        %v1313 = vadd.f32 %v1312, %v1306
        %v1314 = vld [vmem:[%s6] sm:$0xff]
        %v1315 = vld [vmem:[%s6 + $0x8] sm:$0xff]
        %v1316 = vld [vmem:[%s6 + $0x10] sm:$0xff]
        %v1317 = vld [vmem:[%s6 + $0x18] sm:$0xff]
        %v1318 = vld [vmem:[%s6 + $0x20] sm:$0xff]
        %v1319 = vld [vmem:[%s6 + $0x28] sm:$0xff]
        %v1320 = vld [vmem:[%s6 + $0x30] sm:$0xff]
        %v1321 = vld [vmem:[%s6 + $0x38] sm:$0xff]
        %v1322 = vld [vmem:[%s6 + $0x40] sm:$0xff]
        %v1323 = vld [vmem:[%s6 + $0x48] sm:$0xff]
        %v1324 = vld [vmem:[%s6 + $0x50] sm:$0xff]
        %v1325 = vld [vmem:[%s6 + $0x58] sm:$0xff]
        %v1326 = vld [vmem:[%s6 + $0x60] sm:$0xff]
        %v1327 = vld [vmem:[%s6 + $0x68] sm:$0xff]
        %v1328 = vld [vmem:[%s6 + $0x70] sm:$0xff]
        %v1329 = vld [vmem:[%s6 + $0x78] sm:$0xff]
        %v1330 = vld [vmem:[%s6 + $0x80] sm:$0xff]
        %v1331 = vld [vmem:[%s6 + $0x88] sm:$0xff]
        %v1332 = vld [vmem:[%s6 + $0x90] sm:$0xff]
        %v1333 = vld [vmem:[%s6 + $0x98] sm:$0xff]
        %v1334 = vld [vmem:[%s6 + $0xa0] sm:$0xff]
        %v1335 = vld [vmem:[%s6 + $0xa8] sm:$0xff]
        %v1336 = vld [vmem:[%s6 + $0xb0] sm:$0xff]
        %v1337 = vld [vmem:[%s6 + $0xb8] sm:$0xff]
        %v1338 = vld [vmem:[%s6 + $0xc0] sm:$0xff]
        %v1339 = vld [vmem:[%s6 + $0xc8] sm:$0xff]
        %v1340 = vld [vmem:[%s6 + $0xd0] sm:$0xff]
        %v1341 = vld [vmem:[%s6 + $0xd8] sm:$0xff]
        %v1342 = vld [vmem:[%s6 + $0xe0] sm:$0xff]
        %v1343 = vld [vmem:[%s6 + $0xe8] sm:$0xff]
        %v1344 = vld [vmem:[%s6 + $0xf0] sm:$0xff]
        %v1345 = vld [vmem:[%s6 + $0xf8] sm:$0xff]
        %v1346 = vld [vmem:[%s7] sm:$0x3]
        %v1348 = vlaneseq
        %v1349 = vshrl.u32 %v1348, 7
        %v1350 = vsub.s32 0, %v1349
        %v1351 = vrot.slane %v1346, %v1350
        %v1352 = vlaneseq
        %v1353 = vshrl.u32 %v1352, 7
        %v1354 = vsub.s32 1, %v1353
        %v1355 = vrot.slane %v1346, %v1354
        %1358 = vmatprep.subr.mxu0 %v1345
        %1359 = vmatpush1.msra.mxu0 %v1344
        %1360 = vmatprep.subr.mxu0 %v1343
        %1361 = vmatpush1.msra.mxu0 %v1342
        %1362 = vmatprep.subr.mxu0 %v1341
        %1363 = vmatpush1.msra.mxu0 %v1340
        %1364 = vmatprep.subr.mxu0 %v1339
        %1365 = vmatpush1.msra.mxu0 %v1338
        %1366 = vmatprep.subr.mxu0 %v1337
        %1367 = vmatpush1.msra.mxu0 %v1336
        %1368 = vmatprep.subr.mxu0 %v1335
        %1369 = vmatpush1.msra.mxu0 %v1334
        %1370 = vmatprep.subr.mxu0 %v1333
        %1371 = vmatpush1.msra.mxu0 %v1332
        %1372 = vmatprep.subr.mxu0 %v1331
        %1373 = vmatpush1.msra.mxu0 %v1330
        %1374 = vmatprep.subr.mxu0 %v1329
        %1375 = vmatpush1.msra.mxu0 %v1328
        %1376 = vmatprep.subr.mxu0 %v1327
        %1377 = vmatpush1.msra.mxu0 %v1326
        %1378 = vmatprep.subr.mxu0 %v1325
        %1379 = vmatpush1.msra.mxu0 %v1324
        %1380 = vmatprep.subr.mxu0 %v1323
        %1381 = vmatpush1.msra.mxu0 %v1322
        %1382 = vmatprep.subr.mxu0 %v1321
        %1383 = vmatpush1.msra.mxu0 %v1320
        %1384 = vmatprep.subr.mxu0 %v1319
        %1385 = vmatpush1.msra.mxu0 %v1318
        %1386 = vmatprep.subr.mxu0 %v1317
        %1387 = vmatpush1.msra.mxu0 %v1316
        %1388 = vmatprep.subr.mxu0 %v1315
        %1389 = vmatpush1.msra.mxu0 %v1314
        %1390 = vmatprep.subr.mxu0 0.0
        %1391 = vmatpush2.msra.mxu0 0.0
        %1392 = vmatprep.subr.mxu0 0.0
        %1393 = vmatpush2.msra.mxu0 0.0
        %1394 = vmatprep.subr.mxu0 0.0
        %1395 = vmatpush2.msra.mxu0 0.0
        %1396 = vmatprep.subr.mxu0 0.0
        %1397 = vmatpush2.msra.mxu0 0.0
        %1398 = vmatprep.subr.mxu0 0.0
        %1399 = vmatpush2.msra.mxu0 0.0
        %1400 = vmatprep.subr.mxu0 0.0
        %1401 = vmatpush2.msra.mxu0 0.0
        %1402 = vmatprep.subr.mxu0 0.0
        %1403 = vmatpush2.msra.mxu0 0.0
        %1404 = vmatprep.subr.mxu0 0.0
        %1405 = vmatpush2.msra.mxu0 0.0
        %1406 = vmatprep.subr.mxu0 0.0
        %1407 = vmatpush2.msra.mxu0 0.0
        %1408 = vmatprep.subr.mxu0 0.0
        %1409 = vmatpush2.msra.mxu0 0.0
        %1410 = vmatprep.subr.mxu0 0.0
        %1411 = vmatpush2.msra.mxu0 0.0
        %1412 = vmatprep.subr.mxu0 0.0
        %1413 = vmatpush2.msra.mxu0 0.0
        %1414 = vmatprep.subr.mxu0 0.0
        %1415 = vmatpush2.msra.mxu0 0.0
        %1416 = vmatprep.subr.mxu0 0.0
        %1417 = vmatpush2.msra.mxu0 0.0
        %1418 = vmatprep.subr.mxu0 0.0
        %1419 = vmatpush2.msra.mxu0 0.0
        %1420 = vmatprep.subr.mxu0 0.0
        %1421 = vmatpush2.msra.mxu0 0.0
        %1422 = vmatprep.mubr.f32.mxu0 0.0
        %1423 = vmatmul.mubr.f32.gmra.mxu0 %v1313
        %v1424 = vpop.f32.mrf.mxu0
        %v1425 = vadd.f32 %v1351, %v1424
        %v1426 = vpop.f32.mrf.mxu0
        %v1427 = vadd.f32 %v1355, %v1426
        %1428 = vdwg.mxu0
        %v1429 = vmax.f32 %v1425, 0.0
        %v1430 = vmax.f32 %v1427, 0.0
        %v1431 = vld [vmem:[%s8] sm:$0xff]
        %v1432 = vld [vmem:[%s8 + $0x8] sm:$0xff]
        %v1433 = vld [vmem:[%s8 + $0x10] sm:$0xff]
        %v1434 = vld [vmem:[%s8 + $0x18] sm:$0xff]
        %v1435 = vld [vmem:[%s8 + $0x20] sm:$0xff]
        %v1436 = vld [vmem:[%s8 + $0x28] sm:$0xff]
        %v1437 = vld [vmem:[%s8 + $0x30] sm:$0xff]
        %v1438 = vld [vmem:[%s8 + $0x38] sm:$0xff]
        %v1439 = vld [vmem:[%s8 + $0x40] sm:$0xff]
        %v1440 = vld [vmem:[%s8 + $0x48] sm:$0xff]
        %v1441 = vld [vmem:[%s8 + $0x50] sm:$0xff]
        %v1442 = vld [vmem:[%s8 + $0x58] sm:$0xff]
        %v1443 = vld [vmem:[%s8 + $0x60] sm:$0xff]
        %v1444 = vld [vmem:[%s8 + $0x68] sm:$0xff]
        %v1445 = vld [vmem:[%s8 + $0x70] sm:$0xff]
        %v1446 = vld [vmem:[%s8 + $0x78] sm:$0xff]
        %v1447 = vld [vmem:[%s8 + $0x80] sm:$0xff]
        %v1448 = vld [vmem:[%s8 + $0x88] sm:$0xff]
        %v1449 = vld [vmem:[%s8 + $0x90] sm:$0xff]
        %v1450 = vld [vmem:[%s8 + $0x98] sm:$0xff]
        %v1451 = vld [vmem:[%s8 + $0xa0] sm:$0xff]
        %v1452 = vld [vmem:[%s8 + $0xa8] sm:$0xff]
        %v1453 = vld [vmem:[%s8 + $0xb0] sm:$0xff]
        %v1454 = vld [vmem:[%s8 + $0xb8] sm:$0xff]
        %v1455 = vld [vmem:[%s8 + $0xc0] sm:$0xff]
        %v1456 = vld [vmem:[%s8 + $0xc8] sm:$0xff]
        %v1457 = vld [vmem:[%s8 + $0xd0] sm:$0xff]
        %v1458 = vld [vmem:[%s8 + $0xd8] sm:$0xff]
        %v1459 = vld [vmem:[%s8 + $0xe0] sm:$0xff]
        %v1460 = vld [vmem:[%s8 + $0xe8] sm:$0xff]
        %v1461 = vld [vmem:[%s8 + $0xf0] sm:$0xff]
        %v1462 = vld [vmem:[%s8 + $0xf8] sm:$0xff]
        %v1463 = vld [vmem:[%s9] sm:$0x1]
        %v1465 = vlaneseq
        %v1466 = vshrl.u32 %v1465, 7
        %v1467 = vsub.s32 0, %v1466
        %v1468 = vrot.slane %v1463, %v1467
        %1470 = vmatprep.subr.mxu0 0.0
        %1471 = vmatpush1.msra.mxu0 %v1446
        %1472 = vmatprep.subr.mxu0 0.0
        %1473 = vmatpush1.msra.mxu0 %v1445
        %1474 = vmatprep.subr.mxu0 0.0
        %1475 = vmatpush1.msra.mxu0 %v1444
        %1476 = vmatprep.subr.mxu0 0.0
        %1477 = vmatpush1.msra.mxu0 %v1443
        %1478 = vmatprep.subr.mxu0 0.0
        %1479 = vmatpush1.msra.mxu0 %v1442
        %1480 = vmatprep.subr.mxu0 0.0
        %1481 = vmatpush1.msra.mxu0 %v1441
        %1482 = vmatprep.subr.mxu0 0.0
        %1483 = vmatpush1.msra.mxu0 %v1440
        %1484 = vmatprep.subr.mxu0 0.0
        %1485 = vmatpush1.msra.mxu0 %v1439
        %1486 = vmatprep.subr.mxu0 0.0
        %1487 = vmatpush1.msra.mxu0 %v1438
        %1488 = vmatprep.subr.mxu0 0.0
        %1489 = vmatpush1.msra.mxu0 %v1437
        %1490 = vmatprep.subr.mxu0 0.0
        %1491 = vmatpush1.msra.mxu0 %v1436
        %1492 = vmatprep.subr.mxu0 0.0
        %1493 = vmatpush1.msra.mxu0 %v1435
        %1494 = vmatprep.subr.mxu0 0.0
        %1495 = vmatpush1.msra.mxu0 %v1434
        %1496 = vmatprep.subr.mxu0 0.0
        %1497 = vmatpush1.msra.mxu0 %v1433
        %1498 = vmatprep.subr.mxu0 0.0
        %1499 = vmatpush1.msra.mxu0 %v1432
        %1500 = vmatprep.subr.mxu0 0.0
        %1501 = vmatpush1.msra.mxu0 %v1431
        %1502 = vmatprep.subr.mxu0 0.0
        %1503 = vmatpush2.msra.mxu0 %v1462
        %1504 = vmatprep.subr.mxu0 0.0
        %1505 = vmatpush2.msra.mxu0 %v1461
        %1506 = vmatprep.subr.mxu0 0.0
        %1507 = vmatpush2.msra.mxu0 %v1460
        %1508 = vmatprep.subr.mxu0 0.0
        %1509 = vmatpush2.msra.mxu0 %v1459
        %1510 = vmatprep.subr.mxu0 0.0
        %1511 = vmatpush2.msra.mxu0 %v1458
        %1512 = vmatprep.subr.mxu0 0.0
        %1513 = vmatpush2.msra.mxu0 %v1457
        %1514 = vmatprep.subr.mxu0 0.0
        %1515 = vmatpush2.msra.mxu0 %v1456
        %1516 = vmatprep.subr.mxu0 0.0
        %1517 = vmatpush2.msra.mxu0 %v1455
        %1518 = vmatprep.subr.mxu0 0.0
        %1519 = vmatpush2.msra.mxu0 %v1454
        %1520 = vmatprep.subr.mxu0 0.0
        %1521 = vmatpush2.msra.mxu0 %v1453
        %1522 = vmatprep.subr.mxu0 0.0
        %1523 = vmatpush2.msra.mxu0 %v1452
        %1524 = vmatprep.subr.mxu0 0.0
        %1525 = vmatpush2.msra.mxu0 %v1451
        %1526 = vmatprep.subr.mxu0 0.0
        %1527 = vmatpush2.msra.mxu0 %v1450
        %1528 = vmatprep.subr.mxu0 0.0
        %1529 = vmatpush2.msra.mxu0 %v1449
        %1530 = vmatprep.subr.mxu0 0.0
        %1531 = vmatpush2.msra.mxu0 %v1448
        %1532 = vmatprep.subr.mxu0 0.0
        %1533 = vmatpush2.msra.mxu0 %v1447
        %1534 = vmatprep.mubr.f32.mxu0 %v1430
        %1535 = vmatmul.mubr.f32.gmra.mxu0 %v1429
        %v1536 = vpop.f32.mrf.mxu0
        %v1537 = vadd.f32 %v1468, %v1536
        %v1538 = vpop.f32.mrf.mxu0
        %1539 = vdwg.mxu0
        %vm1540 = vcmask 31744
        %1541 = vst.msk [vmem:[%s447] sm:$0xff] %vm1540, %v1537
        %p1542 = scmp.lt.s32.totalorder %s26, 1
        %s1543 = scalar_select %p1542, %s26, 1
        %s1544 = smul.addr %s1543, 8
        %s1545 = scalar_lea.vmem %s10, %s1544
        // Predicated region
        $region81: #{tpu_custom_call.1} parent=59 // pred_check
          %p1546 = pneg %p264
        $region82: #{tpu_custom_call.1} parent=59 // pred_check_branch
          %1548 = sbr.rel (%p1546) target = $region84
        $region83: #{tpu_custom_call.1} parent=59 // pred_region
          _
        $region84: #{tpu_custom_call.1} parent=59 // pred_fallthru
          _
      $region60: #{tpu_custom_call.1} parent=5 // pred_fallthru
        _
      %p1549 = scmp.le.s32.totalorder 2, %s21
      // Predicated region
      $region85: #{tpu_custom_call.1} parent=5 // pred_check
        %p1550 = pneg %p1549
      $region86: #{tpu_custom_call.1} parent=5 // pred_check_branch
        %1552 = sbr.rel (%p1550) target = $region88
      $region87: #{tpu_custom_call.1} parent=5 // pred_region
        %s1553 = ssub.s32 %s21, 2
        // Predicated region
        $region89: #{tpu_custom_call.1} parent=87 // pred_check
          %p1554 = pneg %p270
        $region90: #{tpu_custom_call.1} parent=87 // pred_check_branch
          %1556 = sbr.rel (%p1554) target = $region92
        $region91: #{tpu_custom_call.1} parent=87 // pred_region
          %p1557 = scmp.lt.s32.totalorder %s27, 1
          %s1558 = scalar_select %p1557, %s27, 1
          %s1559 = smul.addr %s1558, 8
          %s1560 = scalar_lea.vmem %s10, %s1559
        $region92: #{tpu_custom_call.1} parent=87 // pred_fallthru
          _
      $region88: #{tpu_custom_call.1} parent=5 // pred_fallthru
        _
    $region6: #{tpu_custom_call.1} parent=1 // loop_footer
      %s25 = sadd.s32 1, %s21
    $region7: #{tpu_custom_call.1} parent=1 // loop_footer_branch
      %20 = sbr.rel target = $region3
    $region8: #{tpu_custom_call.1} parent=1 // loop_exit
      _
    %1561 = vsyncpa [#allocation3], 1
    %s1562 = scalar_lea.sflag [#allocation3], 1
    %1563 = vsyncpa %s1562, 1
    %1564 = vsyncpa [#allocation5], 1
    %1565 = vsyncpa [#allocation8], 1

</llo_original>
